<compile_context>
chip_gen: v7x
topology: tpu7x:2x2x1
jax: 0.10.0
libtpu: 0.0.40
codegen_flags: <defaults>
</compile_context>

<pallas_src>
import functools

import jax
import jax.numpy as jnp
from jax import lax
from jax.experimental import pallas as pl
from jax.experimental.pallas import tpu as pltpu

TEMP = 0.5
N_COLS = 104            # hard-coded loop bound in the torch module
_LANE = 128             # lane-dense padding of the stock (j) axis
_SUBLANE = 8            # sublane alignment of the query (i) axis
_FLATTEN_MAX_BATCH = 4  # up to this batch, flatten batch into the MXU width


def _infonce_flat_kernel(x_ref, lmask_ref, o_ref, *, batch, sp, n_cols_pad,
                         temp, s_orig):
    """Small-batch path: one (B*SP, D) @ (D, B*SP) matmul fills the MXU."""
    # Fold 1/temp into x once: <a*x_i, a*x_j> = <x_i,x_j>/temp, a = temp**-0.5.
    xs = x_ref[...] * (temp ** -0.5)                       # (B*SP, D) f32
    big = lax.dot_general(
        xs, xs, (((1,), (1,)), ((), ())),
        preferred_element_type=jnp.float32,
        precision=lax.Precision.HIGHEST)                   # (B*SP, B*SP) f32
    lmask = lmask_ref[...]                                 # (ncp, SP): 0 / -inf

    per_col = jnp.zeros((n_cols_pad, 1), jnp.float32)
    for b in range(batch):                                 # tiny static unroll
        r0 = b * sp
        xi = xs[r0:r0 + n_cols_pad, :]                     # (ncp, D)
        s_b = big[r0:r0 + n_cols_pad, r0:r0 + sp]          # (ncp, SP) diag block
        # TODO(synk): no max-subtraction before exp, mirroring the fragile
        # torch code (overflowing columns go non-finite and are dropped).
        e = jnp.exp(s_b + lmask)                           # masked positions -> 0
        neg = jnp.sum(e, axis=-1, keepdims=True)           # (ncp, 1)
        log_pos = jnp.sum(xi * xi, axis=-1, keepdims=True) # ||x_i||^2 / temp
        per_col = per_col + (jnp.log(neg) - log_pos)

    # TODO(synk): torch adds torch.randn(0) (an empty tensor) for non-finite
    # columns which silently corrupts the result; here they are skipped.
    keep = jnp.isfinite(per_col)
    total = jnp.sum(jnp.where(keep, per_col, 0.0))
    o_ref[0, 0] = total / (s_orig * batch)


def _infonce_batched_kernel(x_ref, lmask_ref, o_ref, *, n_cols_pad, temp,
                            s_orig):
    """Large-batch fallback: batched einsum (flat path's FLOPs grow as B^2)."""
    x = x_ref[...]                                         # (B, SP, D)
    B = x.shape[0]
    xs = x * (temp ** -0.5)
    xs_i = xs[:, :n_cols_pad, :]                           # real query columns
    scores = jnp.einsum("bid,bjd->bij", xs_i, xs,
                        preferred_element_type=jnp.float32,
                        precision=lax.Precision.HIGHEST)   # (B, ncp, SP)
    e = jnp.exp(scores + lmask_ref[...][None, :, :])
    neg = jnp.sum(e, axis=-1, keepdims=True)               # (B, ncp, 1)
    log_pos = jnp.sum(xs_i * xs_i, axis=-1, keepdims=True)
    per_col = jnp.sum(jnp.log(neg) - log_pos, axis=0)      # (ncp, 1)
    keep = jnp.isfinite(per_col)
    o_ref[0, 0] = jnp.sum(jnp.where(keep, per_col, 0.0)) / (s_orig * B)


def build_neg_log_mask(adj, n_cols, sp):
    """(ncp, SP) additive log-mask: 0 where adj[j, i] == 0 (valid negative),
    -inf elsewhere (including padded rows/columns).

    adj is constant across training steps -> call this once outside the
    jitted step and reuse the result."""
    adj = jnp.asarray(adj)
    s = adj.shape[0]
    ncp = pl.cdiv(n_cols, _SUBLANE) * _SUBLANE
    lmask = jnp.where(adj[:, :n_cols].T == 0,
                      jnp.float32(0.0), jnp.float32(-jnp.inf))   # (n_cols, S)
    lmask = jnp.pad(lmask, ((0, ncp - n_cols), (0, sp - s)),
                    constant_values=-jnp.inf)
    return lmask.astype(jnp.float32)


def infonce_loss(hgat_output, adj, *, n_cols=N_COLS, temp=TEMP):
    """Pallas implementation of InfoNCE_Loss.forward."""
    x = jnp.asarray(hgat_output, jnp.float32)
    B, S, D = x.shape

    # Pad the stock (j) axis to a lane-dense multiple of 128; padded rows of x
    # are zero and the log-mask is -inf there, so they never count as
    # negatives.  Query (i) axis is the hard-coded 104 columns (13*8 aligned).
    SP = pl.cdiv(S, _LANE) * _LANE
    ncp = pl.cdiv(n_cols, _SUBLANE) * _SUBLANE
    x_pad = jnp.pad(x, ((0, 0), (0, SP - S), (0, 0)))
    # TODO(synk): hoist build_neg_log_mask / x padding out of the per-step
    # graph when this is called inside a jitted training step.
    lmask = build_neg_log_mask(adj, n_cols, SP)

    flatten = B <= _FLATTEN_MAX_BATCH
    if flatten:
        kernel = functools.partial(_infonce_flat_kernel, batch=B, sp=SP,
                                   n_cols_pad=ncp, temp=temp, s_orig=S)
        x_in = x_pad.reshape(B * SP, D)
        flops = 2 * (B * SP) * (B * SP) * D
    else:
        kernel = functools.partial(_infonce_batched_kernel, n_cols_pad=ncp,
                                   temp=temp, s_orig=S)
        x_in = x_pad
        flops = 2 * B * ncp * SP * D

    cost = pl.CostEstimate(
        flops=int(flops),
        transcendentals=int(B * ncp * SP + B * ncp),
        bytes_accessed=int(x_in.size * 4 + lmask.size * 4 + 4),
    )

    # TODO(synk): if B or S grows, grid over B with
    # dimension_semantics=("parallel",) so v7x's second TensorCore is used and
    # the (i, j) intermediate stays inside its smaller 64 MiB VMEM.
    out = pl.pallas_call(
        kernel,
        out_shape=jax.ShapeDtypeStruct((1, 1), jnp.float32),
        in_specs=[
            pl.BlockSpec(memory_space=pltpu.MemorySpace.VMEM),
            pl.BlockSpec(memory_space=pltpu.MemorySpace.VMEM),
        ],
        out_specs=pl.BlockSpec(memory_space=pltpu.MemorySpace.SMEM),
        cost_estimate=cost,
    )(x_in, lmask)
    return out[0, 0]


def _ref_infonce(hgat_output, adj, n_cols=N_COLS, temp=TEMP):
    """Pure-JAX f32 reference mirroring the torch loop."""
    x = jnp.asarray(hgat_output, jnp.float32)
    B, S, D = x.shape
    scores = jnp.einsum("bid,bjd->bij", x[:, :n_cols], x,
                        precision=lax.Precision.HIGHEST) / temp   # (B, nc, S)
    maskT = (adj[:, :n_cols] == 0).astype(jnp.float32).T          # (nc, S)
    neg = jnp.sum(jnp.exp(scores) * maskT[None], axis=-1)         # (B, nc)
    log_pos = jnp.einsum("bid,bid->bi", x[:, :n_cols], x[:, :n_cols]) / temp
    per_col = jnp.sum(jnp.log(neg) - log_pos, axis=0)             # (nc,)
    keep = jnp.isfinite(per_col)
    return jnp.sum(jnp.where(keep, per_col, 0.0)) / S / B


if __name__ == "__main__":
    key = jax.random.PRNGKey(0)
    k1, k2 = jax.random.split(key)

    # stock must cover the hard-coded 104-column loop -> stock = 104.
    B, S, D = 2, 104, 32
    hgat_output = 0.1 * jax.random.normal(k1, (B, S, D), dtype=jnp.float32)
    adj = jax.random.bernoulli(k2, 0.3, (S, S)).astype(jnp.float32)

    loss = infonce_loss(hgat_output, adj)
    loss = jax.block_until_ready(loss)

    ref = _ref_infonce(hgat_output, adj)
    # f32 operands + precision=HIGHEST in the kernel -> tight tolerance.
    assert jnp.allclose(loss, ref, rtol=1e-4, atol=1e-5), (loss, ref)

    print("KERNEL_OK")
</pallas_src>

<mosaic_0001>
module attributes {stable_mosaic.version = 11 : i64} {
  func.func @_infonce_flat_kernel(%arg0: memref<256x32xf32, #tpu.memory_space<vmem>>, %arg1: memref<104x128xf32, #tpu.memory_space<vmem>>, %arg2: memref<1x1xf32, #tpu.memory_space<smem>>) attributes {dimension_semantics = [], scalar_prefetch = 0 : i64, scratch_operands = 0 : i64, tpu.core_type = #tpu.core_type<tc>} {
    %c0 = arith.constant 0 : index
    %c0_0 = arith.constant 0 : index
    %0 = vector.load %arg0[%c0, %c0_0] : memref<256x32xf32, #tpu.memory_space<vmem>>, vector<256x32xf32>
    %cst = arith.constant 1.41421354 : f32
    %1 = vector.broadcast %cst : f32 to vector<256x32xf32>
    %2 = arith.mulf %0, %1 : vector<256x32xf32>
    %cst_1 = arith.constant dense<0.000000e+00> : vector<256x256xf32>
    %3 = tpu.matmul %2, %2, %cst_1 {dimension_numbers = #tpu.dot_dimension_numbers<[1], [1], [0], [0], [0, 0, 1, 0], [], []>, precision = #tpu.contract_precision<fp32>} : vector<256x32xf32>, vector<256x32xf32>, vector<256x256xf32> -> vector<256x256xf32>
    %c0_2 = arith.constant 0 : index
    %c0_3 = arith.constant 0 : index
    %4 = vector.load %arg1[%c0_2, %c0_3] : memref<104x128xf32, #tpu.memory_space<vmem>>, vector<104x128xf32>
    %cst_4 = arith.constant 0.000000e+00 : f32
    %5 = vector.broadcast %cst_4 : f32 to vector<104x1xf32>
    %6 = vector.extract_strided_slice %2 {offsets = [0, 0], sizes = [104, 32], strides = [1, 1]} : vector<256x32xf32> to vector<104x32xf32>
    %7 = vector.extract_strided_slice %3 {offsets = [0, 0], sizes = [104, 128], strides = [1, 1]} : vector<256x256xf32> to vector<104x128xf32>
    %8 = arith.addf %7, %4 : vector<104x128xf32>
    %9 = math.exp %8 : vector<104x128xf32>
    %cst_5 = arith.constant dense<0.000000e+00> : vector<104xf32>
    %10 = vector.multi_reduction <add>, %9, %cst_5 [1] : vector<104x128xf32> to vector<104xf32>
    %11 = vector.shape_cast %10 : vector<104xf32> to vector<104x1xf32>
    %12 = arith.mulf %6, %6 : vector<104x32xf32>
    %cst_6 = arith.constant dense<0.000000e+00> : vector<104xf32>
    %13 = vector.multi_reduction <add>, %12, %cst_6 [1] : vector<104x32xf32> to vector<104xf32>
    %14 = vector.shape_cast %13 : vector<104xf32> to vector<104x1xf32>
    %15 = math.log %11 : vector<104x1xf32>
    %16 = arith.subf %15, %14 : vector<104x1xf32>
    %17 = arith.addf %5, %16 : vector<104x1xf32>
    %18 = vector.extract_strided_slice %2 {offsets = [128, 0], sizes = [104, 32], strides = [1, 1]} : vector<256x32xf32> to vector<104x32xf32>
    %19 = vector.extract_strided_slice %3 {offsets = [128, 128], sizes = [104, 128], strides = [1, 1]} : vector<256x256xf32> to vector<104x128xf32>
    %20 = arith.addf %19, %4 : vector<104x128xf32>
    %21 = math.exp %20 : vector<104x128xf32>
    %cst_7 = arith.constant dense<0.000000e+00> : vector<104xf32>
    %22 = vector.multi_reduction <add>, %21, %cst_7 [1] : vector<104x128xf32> to vector<104xf32>
    %23 = vector.shape_cast %22 : vector<104xf32> to vector<104x1xf32>
    %24 = arith.mulf %18, %18 : vector<104x32xf32>
    %cst_8 = arith.constant dense<0.000000e+00> : vector<104xf32>
    %25 = vector.multi_reduction <add>, %24, %cst_8 [1] : vector<104x32xf32> to vector<104xf32>
    %26 = vector.shape_cast %25 : vector<104xf32> to vector<104x1xf32>
    %27 = math.log %23 : vector<104x1xf32>
    %28 = arith.subf %27, %26 : vector<104x1xf32>
    %29 = arith.addf %17, %28 : vector<104x1xf32>
    %30 = tpu.weird %29 : vector<104x1xf32> -> vector<104x1xi1>
    %cst_9 = arith.constant dense<true> : vector<104x1xi1>
    %31 = arith.xori %30, %cst_9 : vector<104x1xi1>
    %cst_10 = arith.constant 0.000000e+00 : f32
    %32 = vector.broadcast %cst_10 : f32 to vector<104x1xf32>
    %33 = arith.select %31, %29, %32 : vector<104x1xi1>, vector<104x1xf32>
    %34 = vector.shape_cast %33 : vector<104x1xf32> to vector<1x104x1xf32>
    %cst_11 = arith.constant dense<0.000000e+00> : vector<1xf32>
    %35 = vector.multi_reduction <add>, %34, %cst_11 [1, 2] : vector<1x104x1xf32> to vector<1xf32>
    %36 = vector.shape_cast %35 : vector<1xf32> to vector<1x1x1xf32>
    %37 = vector.extract %36[0, 0, 0] : f32 from vector<1x1x1xf32>
    %cst_12 = arith.constant 2.080000e+02 : f32
    %38 = arith.divf %37, %cst_12 : f32
    %c0_13 = arith.constant 0 : index
    %c0_14 = arith.constant 0 : index
    %39 = memref.load %arg2[%c0_13, %c0_14] : memref<1x1xf32, #tpu.memory_space<smem>>
    memref.store %38, %arg2[%c0_13, %c0_14] : memref<1x1xf32, #tpu.memory_space<smem>>
    return
  }
}

</mosaic_0001>

<llo_original>
// kernel: tpu_custom_call.1
$region0: #{tpu_custom_call.1}
  #allocation0 [shape = 'u32[]', space=smem, size = 0x4, offset = 0x4, fixed_abs, tag = 'smem constant byte address 0x4 - core index']
  #allocation1 [shape = 'u32[144,128]{1,0:T(1,128)}', space=vmem, size = 0x12000, scoped, tag = 'internal scratch']
  %s0 = inlined_call_operand.vmem [shape: f32[256,32], index: 0, kind: input, shape index: {}]
  %s1 = inlined_call_operand.vmem [shape: f32[104,128], index: 1, kind: input, shape index: {}]
  %s2 = inlined_call_operand.hbm [shape: f32[1,1], index: 2, kind: output, shape index: {}]
  %s3 = sld [smem:[#allocation0]]
  $region18: #{tpu_custom_call.1} parent=0
    _
  %s5 = ssub.s32 1, %s3
  %s6 = scalar_select 0, %s5, %s3
  $region1: #{tpu_custom_call.1} parent=0
    #allocation2 [shape = 'u8[512]{0}', space=smem, size = 0x200, scoped, tag = 'output window, operand 0, single buffered']
    #allocation3 [shape = 's32[1]{0}', space=sflag, size = 0x4, scoped, tag = 'scoped memory for tpu_custom_call.1']
    %7 = vsyncpa [#allocation3], 0
    // Predicated region
    $region2: #{tpu_custom_call.1} parent=1 // pred_check
      _
    $region3: #{tpu_custom_call.1} parent=1 // pred_check_branch
      %9 = sbr.rel (0) target = $region5
    $region4: #{tpu_custom_call.1} parent=1 // pred_region
      _
    $region5: #{tpu_custom_call.1} parent=1 // pred_fallthru
      _
    // Predicated region
    $region6: #{tpu_custom_call.1} parent=1 // pred_check
      _
    $region7: #{tpu_custom_call.1} parent=1 // pred_check_branch
      %11 = sbr.rel (0) target = $region9
    $region8: #{tpu_custom_call.1} parent=1 // pred_region
      _
    $region9: #{tpu_custom_call.1} parent=1 // pred_fallthru
      _
    %v12 = vld [vmem:[%s0] sm:$0xff]
    %v13 = vld [vmem:[%s0 + $0x8] sm:$0xff]
    %v14 = vld [vmem:[%s0 + $0x10] sm:$0xff]
    %v15 = vld [vmem:[%s0 + $0x18] sm:$0xff]
    %v16 = vld [vmem:[%s0 + $0x20] sm:$0xff]
    %v17 = vld [vmem:[%s0 + $0x28] sm:$0xff]
    %v18 = vld [vmem:[%s0 + $0x30] sm:$0xff]
    %v19 = vld [vmem:[%s0 + $0x38] sm:$0xff]
    %v20 = vld [vmem:[%s0 + $0x40] sm:$0xff]
    %v21 = vld [vmem:[%s0 + $0x48] sm:$0xff]
    %v22 = vld [vmem:[%s0 + $0x50] sm:$0xff]
    %v23 = vld [vmem:[%s0 + $0x58] sm:$0xff]
    %v24 = vld [vmem:[%s0 + $0x60] sm:$0xff]
    %v25 = vld [vmem:[%s0 + $0x68] sm:$0xff]
    %v26 = vld [vmem:[%s0 + $0x70] sm:$0xff]
    %v27 = vld [vmem:[%s0 + $0x78] sm:$0xff]
    %v28 = vld [vmem:[%s0 + $0x80] sm:$0xff]
    %v29 = vld [vmem:[%s0 + $0x88] sm:$0xff]
    %v30 = vld [vmem:[%s0 + $0x90] sm:$0xff]
    %v31 = vld [vmem:[%s0 + $0x98] sm:$0xff]
    %v32 = vld [vmem:[%s0 + $0xa0] sm:$0xff]
    %v33 = vld [vmem:[%s0 + $0xa8] sm:$0xff]
    %v34 = vld [vmem:[%s0 + $0xb0] sm:$0xff]
    %v35 = vld [vmem:[%s0 + $0xb8] sm:$0xff]
    %v36 = vld [vmem:[%s0 + $0xc0] sm:$0xff]
    %v37 = vld [vmem:[%s0 + $0xc8] sm:$0xff]
    %v38 = vld [vmem:[%s0 + $0xd0] sm:$0xff]
    %v39 = vld [vmem:[%s0 + $0xd8] sm:$0xff]
    %v40 = vld [vmem:[%s0 + $0xe0] sm:$0xff]
    %v41 = vld [vmem:[%s0 + $0xe8] sm:$0xff]
    %v42 = vld [vmem:[%s0 + $0xf0] sm:$0xff]
    %v43 = vld [vmem:[%s0 + $0xf8] sm:$0xff]
    %v44 = vmul.f32 %v12, 1.4142135
    %v45 = vmul.f32 %v13, 1.4142135
    %v46 = vmul.f32 %v14, 1.4142135
    %v47 = vmul.f32 %v15, 1.4142135
    %v48 = vmul.f32 %v16, 1.4142135
    %v49 = vmul.f32 %v17, 1.4142135
    %v50 = vmul.f32 %v18, 1.4142135
    %v51 = vmul.f32 %v19, 1.4142135
    %v52 = vmul.f32 %v20, 1.4142135
    %v53 = vmul.f32 %v21, 1.4142135
    %v54 = vmul.f32 %v22, 1.4142135
    %v55 = vmul.f32 %v23, 1.4142135
    %v56 = vmul.f32 %v24, 1.4142135
    %v57 = vmul.f32 %v25, 1.4142135
    %v58 = vmul.f32 %v26, 1.4142135
    %v59 = vmul.f32 %v27, 1.4142135
    %v60 = vmul.f32 %v28, 1.4142135
    %v61 = vmul.f32 %v29, 1.4142135
    %v62 = vmul.f32 %v30, 1.4142135
    %v63 = vmul.f32 %v31, 1.4142135
    %v64 = vmul.f32 %v32, 1.4142135
    %v65 = vmul.f32 %v33, 1.4142135
    %v66 = vmul.f32 %v34, 1.4142135
    %v67 = vmul.f32 %v35, 1.4142135
    %v68 = vmul.f32 %v36, 1.4142135
    %v69 = vmul.f32 %v37, 1.4142135
    %v70 = vmul.f32 %v38, 1.4142135
    %v71 = vmul.f32 %v39, 1.4142135
    %v72 = vmul.f32 %v40, 1.4142135
    %v73 = vmul.f32 %v41, 1.4142135
    %v74 = vmul.f32 %v42, 1.4142135
    %v75 = vmul.f32 %v43, 1.4142135
    %vm76 = vcmask 261120
    %v78 = vsel %vm76, %v44, 0
    %v81 = vsel %vm76, %v45, 0
    %v84 = vsel %vm76, %v46, 0
    %v87 = vsel %vm76, %v47, 0
    %v90 = vsel %vm76, %v48, 0
    %v93 = vsel %vm76, %v49, 0
    %v96 = vsel %vm76, %v50, 0
    %v99 = vsel %vm76, %v51, 0
    %v102 = vsel %vm76, %v52, 0
    %v105 = vsel %vm76, %v53, 0
    %v108 = vsel %vm76, %v54, 0
    %v111 = vsel %vm76, %v55, 0
    %v114 = vsel %vm76, %v56, 0
    %v117 = vsel %vm76, %v57, 0
    %v120 = vsel %vm76, %v58, 0
    %v123 = vsel %vm76, %v59, 0
    %v126 = vsel %vm76, %v60, 0
    %v129 = vsel %vm76, %v61, 0
    %v132 = vsel %vm76, %v62, 0
    %v135 = vsel %vm76, %v63, 0
    %v138 = vsel %vm76, %v64, 0
    %v141 = vsel %vm76, %v65, 0
    %v144 = vsel %vm76, %v66, 0
    %v147 = vsel %vm76, %v67, 0
    %v150 = vsel %vm76, %v68, 0
    %v153 = vsel %vm76, %v69, 0
    %v156 = vsel %vm76, %v70, 0
    %v159 = vsel %vm76, %v71, 0
    %v162 = vsel %vm76, %v72, 0
    %v165 = vsel %vm76, %v73, 0
    %v168 = vsel %vm76, %v74, 0
    %v171 = vsel %vm76, %v75, 0
    %173 = vmatprep.subr.mxu0 0.0
    %v174 = vand.u32 %v78, 4294901760
    %175 = vmatpush1.xpose.msra.mxu0 %v174
    %176 = vmatprep.subr.mxu0 0.0
    %v177 = vand.u32 %v81, 4294901760
    %178 = vmatpush1.xpose.msra.mxu0 %v177
    %179 = vmatprep.subr.mxu0 0.0
    %v180 = vand.u32 %v84, 4294901760
    %181 = vmatpush1.xpose.msra.mxu0 %v180
    %182 = vmatprep.subr.mxu0 0.0
    %v183 = vand.u32 %v87, 4294901760
    %184 = vmatpush1.xpose.msra.mxu0 %v183
    %185 = vmatprep.subr.mxu0 0.0
    %v186 = vand.u32 %v90, 4294901760
    %187 = vmatpush1.xpose.msra.mxu0 %v186
    %188 = vmatprep.subr.mxu0 0.0
    %v189 = vand.u32 %v93, 4294901760
    %190 = vmatpush1.xpose.msra.mxu0 %v189
    %191 = vmatprep.subr.mxu0 0.0
    %v192 = vand.u32 %v96, 4294901760
    %193 = vmatpush1.xpose.msra.mxu0 %v192
    %194 = vmatprep.subr.mxu0 0.0
    %v195 = vand.u32 %v99, 4294901760
    %196 = vmatpush1.xpose.msra.mxu0 %v195
    %197 = vmatprep.subr.mxu0 0.0
    %v198 = vand.u32 %v102, 4294901760
    %199 = vmatpush1.xpose.msra.mxu0 %v198
    %200 = vmatprep.subr.mxu0 0.0
    %v201 = vand.u32 %v105, 4294901760
    %202 = vmatpush1.xpose.msra.mxu0 %v201
    %203 = vmatprep.subr.mxu0 0.0
    %v204 = vand.u32 %v108, 4294901760
    %205 = vmatpush1.xpose.msra.mxu0 %v204
    %206 = vmatprep.subr.mxu0 0.0
    %v207 = vand.u32 %v111, 4294901760
    %208 = vmatpush1.xpose.msra.mxu0 %v207
    %209 = vmatprep.subr.mxu0 0.0
    %v210 = vand.u32 %v114, 4294901760
    %211 = vmatpush1.xpose.msra.mxu0 %v210
    %212 = vmatprep.subr.mxu0 0.0
    %v213 = vand.u32 %v117, 4294901760
    %214 = vmatpush1.xpose.msra.mxu0 %v213
    %215 = vmatprep.subr.mxu0 0.0
    %v216 = vand.u32 %v120, 4294901760
    %217 = vmatpush1.xpose.msra.mxu0 %v216
    %218 = vmatprep.subr.mxu0 0.0
    %v219 = vand.u32 %v123, 4294901760
    %220 = vmatpush1.xpose.msra.mxu0 %v219
    %221 = vmatprep.subr.mxu0 0.0
    %v222 = vand.u32 %v126, 4294901760
    %223 = vmatpush1.xpose.msra.mxu0 %v222
    %224 = vmatprep.subr.mxu0 0.0
    %v225 = vand.u32 %v129, 4294901760
    %226 = vmatpush1.xpose.msra.mxu0 %v225
    %227 = vmatprep.subr.mxu0 0.0
    %v228 = vand.u32 %v132, 4294901760
    %229 = vmatpush1.xpose.msra.mxu0 %v228
    %230 = vmatprep.subr.mxu0 0.0
    %v231 = vand.u32 %v135, 4294901760
    %232 = vmatpush1.xpose.msra.mxu0 %v231
    %233 = vmatprep.subr.mxu0 0.0
    %v234 = vand.u32 %v138, 4294901760
    %235 = vmatpush1.xpose.msra.mxu0 %v234
    %236 = vmatprep.subr.mxu0 0.0
    %v237 = vand.u32 %v141, 4294901760
    %238 = vmatpush1.xpose.msra.mxu0 %v237
    %239 = vmatprep.subr.mxu0 0.0
    %v240 = vand.u32 %v144, 4294901760
    %241 = vmatpush1.xpose.msra.mxu0 %v240
    %242 = vmatprep.subr.mxu0 0.0
    %v243 = vand.u32 %v147, 4294901760
    %244 = vmatpush1.xpose.msra.mxu0 %v243
    %245 = vmatprep.subr.mxu0 0.0
    %v246 = vand.u32 %v150, 4294901760
    %247 = vmatpush1.xpose.msra.mxu0 %v246
    %248 = vmatprep.subr.mxu0 0.0
    %v249 = vand.u32 %v153, 4294901760
    %250 = vmatpush1.xpose.msra.mxu0 %v249
    %251 = vmatprep.subr.mxu0 0.0
    %v252 = vand.u32 %v156, 4294901760
    %253 = vmatpush1.xpose.msra.mxu0 %v252
    %254 = vmatprep.subr.mxu0 0.0
    %v255 = vand.u32 %v159, 4294901760
    %256 = vmatpush1.xpose.msra.mxu0 %v255
    %257 = vmatprep.subr.mxu0 0.0
    %v258 = vand.u32 %v162, 4294901760
    %259 = vmatpush1.xpose.msra.mxu0 %v258
    %260 = vmatprep.subr.mxu0 0.0
    %v261 = vand.u32 %v165, 4294901760
    %262 = vmatpush1.xpose.msra.mxu0 %v261
    %263 = vmatprep.subr.mxu0 0.0
    %v264 = vand.u32 %v168, 4294901760
    %265 = vmatpush1.xpose.msra.mxu0 %v264
    %266 = vmatprep.subr.mxu0 0.0
    %v267 = vand.u32 %v171, 4294901760
    %268 = vmatpush1.xpose.msra.mxu0 %v267
    %269 = vmatprep.mubr.f32.mxu0 0.0
    %v270 = vand.u32 %v78, 4294901760
    %v271 = vsub.f32 %v78, %v270
    %v272 = vand.u32 %v271, 4294901760
    %v273 = vsub.f32 %v271, %v272
    %v274 = vand.u32 %v273, 4294901760
    %275 = vmatmul.mubr.f32.gmra.mrb[0].mxu0 %v274
    %v276 = vpop.f32.mrb[0].mxu0
    %v277 = vadd.f32 0.0, %v276
    %v278 = vpop.f32.mrb[0].mxu0
    %279 = vmatprep.mubr.f32.mxu0 0.0
    %v280 = vand.u32 %v81, 4294901760
    %v281 = vsub.f32 %v81, %v280
    %v282 = vand.u32 %v281, 4294901760
    %v283 = vsub.f32 %v281, %v282
    %v284 = vand.u32 %v283, 4294901760
    %285 = vmatmul.mubr.f32.gmra.mrb[0].mxu0 %v284
    %v286 = vpop.f32.mrb[0].mxu0
    %v287 = vadd.f32 0.0, %v286
    %v288 = vpop.f32.mrb[0].mxu0
    %289 = vmatprep.mubr.f32.mxu0 0.0
    %v290 = vand.u32 %v84, 4294901760
    %v291 = vsub.f32 %v84, %v290
    %v292 = vand.u32 %v291, 4294901760
    %v293 = vsub.f32 %v291, %v292
    %v294 = vand.u32 %v293, 4294901760
    %295 = vmatmul.mubr.f32.gmra.mrb[0].mxu0 %v294
    %v296 = vpop.f32.mrb[0].mxu0
    %v297 = vadd.f32 0.0, %v296
    %v298 = vpop.f32.mrb[0].mxu0
    %299 = vmatprep.mubr.f32.mxu0 0.0
    %v300 = vand.u32 %v87, 4294901760
    %v301 = vsub.f32 %v87, %v300
    %v302 = vand.u32 %v301, 4294901760
    %v303 = vsub.f32 %v301, %v302
    %v304 = vand.u32 %v303, 4294901760
    %305 = vmatmul.mubr.f32.gmra.mrb[0].mxu0 %v304
    %v306 = vpop.f32.mrb[0].mxu0
    %v307 = vadd.f32 0.0, %v306
    %v308 = vpop.f32.mrb[0].mxu0
    %309 = vmatprep.mubr.f32.mxu0 0.0
    %v310 = vand.u32 %v90, 4294901760
    %v311 = vsub.f32 %v90, %v310
    %v312 = vand.u32 %v311, 4294901760
    %v313 = vsub.f32 %v311, %v312
    %v314 = vand.u32 %v313, 4294901760
    %315 = vmatmul.mubr.f32.gmra.mrb[0].mxu0 %v314
    %v316 = vpop.f32.mrb[0].mxu0
    %v317 = vadd.f32 0.0, %v316
    %v318 = vpop.f32.mrb[0].mxu0
    %319 = vmatprep.mubr.f32.mxu0 0.0
    %v320 = vand.u32 %v93, 4294901760
    %v321 = vsub.f32 %v93, %v320
    %v322 = vand.u32 %v321, 4294901760
    %v323 = vsub.f32 %v321, %v322
    %v324 = vand.u32 %v323, 4294901760
    %325 = vmatmul.mubr.f32.gmra.mrb[0].mxu0 %v324
    %v326 = vpop.f32.mrb[0].mxu0
    %v327 = vadd.f32 0.0, %v326
    %v328 = vpop.f32.mrb[0].mxu0
    %329 = vmatprep.mubr.f32.mxu0 0.0
    %v330 = vand.u32 %v96, 4294901760
    %v331 = vsub.f32 %v96, %v330
    %v332 = vand.u32 %v331, 4294901760
    %v333 = vsub.f32 %v331, %v332
    %v334 = vand.u32 %v333, 4294901760
    %335 = vmatmul.mubr.f32.gmra.mrb[0].mxu0 %v334
    %v336 = vpop.f32.mrb[0].mxu0
    %v337 = vadd.f32 0.0, %v336
    %v338 = vpop.f32.mrb[0].mxu0
    %339 = vmatprep.mubr.f32.mxu0 0.0
    %v340 = vand.u32 %v99, 4294901760
    %v341 = vsub.f32 %v99, %v340
    %v342 = vand.u32 %v341, 4294901760
    %v343 = vsub.f32 %v341, %v342
    %v344 = vand.u32 %v343, 4294901760
    %345 = vmatmul.mubr.f32.gmra.mrb[0].mxu0 %v344
    %v346 = vpop.f32.mrb[0].mxu0
    %v347 = vadd.f32 0.0, %v346
    %v348 = vpop.f32.mrb[0].mxu0
    %349 = vmatprep.mubr.f32.mxu0 0.0
    %v350 = vand.u32 %v102, 4294901760
    %v351 = vsub.f32 %v102, %v350
    %v352 = vand.u32 %v351, 4294901760
    %v353 = vsub.f32 %v351, %v352
    %v354 = vand.u32 %v353, 4294901760
    %355 = vmatmul.mubr.f32.gmra.mrb[0].mxu0 %v354
    %v356 = vpop.f32.mrb[0].mxu0
    %v357 = vadd.f32 0.0, %v356
    %v358 = vpop.f32.mrb[0].mxu0
    %359 = vmatprep.mubr.f32.mxu0 0.0
    %v360 = vand.u32 %v105, 4294901760
    %v361 = vsub.f32 %v105, %v360
    %v362 = vand.u32 %v361, 4294901760
    %v363 = vsub.f32 %v361, %v362
    %v364 = vand.u32 %v363, 4294901760
    %365 = vmatmul.mubr.f32.gmra.mrb[0].mxu0 %v364
    %v366 = vpop.f32.mrb[0].mxu0
    %v367 = vadd.f32 0.0, %v366
    %v368 = vpop.f32.mrb[0].mxu0
    %369 = vmatprep.mubr.f32.mxu0 0.0
    %v370 = vand.u32 %v108, 4294901760
    %v371 = vsub.f32 %v108, %v370
    %v372 = vand.u32 %v371, 4294901760
    %v373 = vsub.f32 %v371, %v372
    %v374 = vand.u32 %v373, 4294901760
    %375 = vmatmul.mubr.f32.gmra.mrb[0].mxu0 %v374
    %v376 = vpop.f32.mrb[0].mxu0
    %v377 = vadd.f32 0.0, %v376
    %v378 = vpop.f32.mrb[0].mxu0
    %379 = vmatprep.mubr.f32.mxu0 0.0
    %v380 = vand.u32 %v111, 4294901760
    %v381 = vsub.f32 %v111, %v380
    %v382 = vand.u32 %v381, 4294901760
    %v383 = vsub.f32 %v381, %v382
    %v384 = vand.u32 %v383, 4294901760
    %385 = vmatmul.mubr.f32.gmra.mrb[0].mxu0 %v384
    %v386 = vpop.f32.mrb[0].mxu0
    %v387 = vadd.f32 0.0, %v386
    %v388 = vpop.f32.mrb[0].mxu0
    %389 = vmatprep.mubr.f32.mxu0 0.0
    %v390 = vand.u32 %v114, 4294901760
    %v391 = vsub.f32 %v114, %v390
    %v392 = vand.u32 %v391, 4294901760
    %v393 = vsub.f32 %v391, %v392
    %v394 = vand.u32 %v393, 4294901760
    %395 = vmatmul.mubr.f32.gmra.mrb[0].mxu0 %v394
    %v396 = vpop.f32.mrb[0].mxu0
    %v397 = vadd.f32 0.0, %v396
    %v398 = vpop.f32.mrb[0].mxu0
    %399 = vmatprep.mubr.f32.mxu0 0.0
    %v400 = vand.u32 %v117, 4294901760
    %v401 = vsub.f32 %v117, %v400
    %v402 = vand.u32 %v401, 4294901760
    %v403 = vsub.f32 %v401, %v402
    %v404 = vand.u32 %v403, 4294901760
    %405 = vmatmul.mubr.f32.gmra.mrb[0].mxu0 %v404
    %v406 = vpop.f32.mrb[0].mxu0
    %v407 = vpop.f32.mrb[0].mxu0
    %408 = vmatprep.mubr.f32.mxu0 0.0
    %v409 = vand.u32 %v120, 4294901760
    %v410 = vsub.f32 %v120, %v409
    %v411 = vand.u32 %v410, 4294901760
    %v412 = vsub.f32 %v410, %v411
    %v413 = vand.u32 %v412, 4294901760
    %414 = vmatmul.mubr.f32.gmra.mrb[0].mxu0 %v413
    %v415 = vpop.f32.mrb[0].mxu0
    %v416 = vpop.f32.mrb[0].mxu0
    %417 = vmatprep.mubr.f32.mxu0 0.0
    %v418 = vand.u32 %v123, 4294901760
    %v419 = vsub.f32 %v123, %v418
    %v420 = vand.u32 %v419, 4294901760
    %v421 = vsub.f32 %v419, %v420
    %v422 = vand.u32 %v421, 4294901760
    %423 = vmatmul.mubr.f32.gmra.mrb[0].mxu0 %v422
    %v424 = vpop.f32.mrb[0].mxu0
    %v425 = vpop.f32.mrb[0].mxu0
    %426 = vmatprep.mubr.f32.mxu0 0.0
    %v427 = vand.u32 %v126, 4294901760
    %v428 = vsub.f32 %v126, %v427
    %v429 = vand.u32 %v428, 4294901760
    %v430 = vsub.f32 %v428, %v429
    %v431 = vand.u32 %v430, 4294901760
    %432 = vmatmul.mubr.f32.gmra.mrb[0].mxu0 %v431
    %v433 = vpop.f32.mrb[0].mxu0
    %v434 = vpop.f32.mrb[0].mxu0
    %v435 = vadd.f32 0.0, %v434
    %436 = vmatprep.mubr.f32.mxu0 0.0
    %v437 = vand.u32 %v129, 4294901760
    %v438 = vsub.f32 %v129, %v437
    %v439 = vand.u32 %v438, 4294901760
    %v440 = vsub.f32 %v438, %v439
    %v441 = vand.u32 %v440, 4294901760
    %442 = vmatmul.mubr.f32.gmra.mrb[0].mxu0 %v441
    %v443 = vpop.f32.mrb[0].mxu0
    %v444 = vpop.f32.mrb[0].mxu0
    %v445 = vadd.f32 0.0, %v444
    %446 = vmatprep.mubr.f32.mxu0 0.0
    %v447 = vand.u32 %v132, 4294901760
    %v448 = vsub.f32 %v132, %v447
    %v449 = vand.u32 %v448, 4294901760
    %v450 = vsub.f32 %v448, %v449
    %v451 = vand.u32 %v450, 4294901760
    %452 = vmatmul.mubr.f32.gmra.mrb[0].mxu0 %v451
    %v453 = vpop.f32.mrb[0].mxu0
    %v454 = vpop.f32.mrb[0].mxu0
    %v455 = vadd.f32 0.0, %v454
    %456 = vmatprep.mubr.f32.mxu0 0.0
    %v457 = vand.u32 %v135, 4294901760
    %v458 = vsub.f32 %v135, %v457
    %v459 = vand.u32 %v458, 4294901760
    %v460 = vsub.f32 %v458, %v459
    %v461 = vand.u32 %v460, 4294901760
    %462 = vmatmul.mubr.f32.gmra.mrb[0].mxu0 %v461
    %v463 = vpop.f32.mrb[0].mxu0
    %v464 = vpop.f32.mrb[0].mxu0
    %v465 = vadd.f32 0.0, %v464
    %466 = vmatprep.mubr.f32.mxu0 0.0
    %v467 = vand.u32 %v138, 4294901760
    %v468 = vsub.f32 %v138, %v467
    %v469 = vand.u32 %v468, 4294901760
    %v470 = vsub.f32 %v468, %v469
    %v471 = vand.u32 %v470, 4294901760
    %472 = vmatmul.mubr.f32.gmra.mrb[0].mxu0 %v471
    %v473 = vpop.f32.mrb[0].mxu0
    %v474 = vpop.f32.mrb[0].mxu0
    %v475 = vadd.f32 0.0, %v474
    %476 = vmatprep.mubr.f32.mxu0 0.0
    %v477 = vand.u32 %v141, 4294901760
    %v478 = vsub.f32 %v141, %v477
    %v479 = vand.u32 %v478, 4294901760
    %v480 = vsub.f32 %v478, %v479
    %v481 = vand.u32 %v480, 4294901760
    %482 = vmatmul.mubr.f32.gmra.mrb[0].mxu0 %v481
    %v483 = vpop.f32.mrb[0].mxu0
    %v484 = vpop.f32.mrb[0].mxu0
    %v485 = vadd.f32 0.0, %v484
    %486 = vmatprep.mubr.f32.mxu0 0.0
    %v487 = vand.u32 %v144, 4294901760
    %v488 = vsub.f32 %v144, %v487
    %v489 = vand.u32 %v488, 4294901760
    %v490 = vsub.f32 %v488, %v489
    %v491 = vand.u32 %v490, 4294901760
    %492 = vmatmul.mubr.f32.gmra.mrb[0].mxu0 %v491
    %v493 = vpop.f32.mrb[0].mxu0
    %v494 = vpop.f32.mrb[0].mxu0
    %v495 = vadd.f32 0.0, %v494
    %496 = vmatprep.mubr.f32.mxu0 0.0
    %v497 = vand.u32 %v147, 4294901760
    %v498 = vsub.f32 %v147, %v497
    %v499 = vand.u32 %v498, 4294901760
    %v500 = vsub.f32 %v498, %v499
    %v501 = vand.u32 %v500, 4294901760
    %502 = vmatmul.mubr.f32.gmra.mrb[0].mxu0 %v501
    %v503 = vpop.f32.mrb[0].mxu0
    %v504 = vpop.f32.mrb[0].mxu0
    %v505 = vadd.f32 0.0, %v504
    %506 = vmatprep.mubr.f32.mxu0 0.0
    %v507 = vand.u32 %v150, 4294901760
    %v508 = vsub.f32 %v150, %v507
    %v509 = vand.u32 %v508, 4294901760
    %v510 = vsub.f32 %v508, %v509
    %v511 = vand.u32 %v510, 4294901760
    %512 = vmatmul.mubr.f32.gmra.mrb[0].mxu0 %v511
    %v513 = vpop.f32.mrb[0].mxu0
    %v514 = vpop.f32.mrb[0].mxu0
    %v515 = vadd.f32 0.0, %v514
    %516 = vmatprep.mubr.f32.mxu0 0.0
    %v517 = vand.u32 %v153, 4294901760
    %v518 = vsub.f32 %v153, %v517
    %v519 = vand.u32 %v518, 4294901760
    %v520 = vsub.f32 %v518, %v519
    %v521 = vand.u32 %v520, 4294901760
    %522 = vmatmul.mubr.f32.gmra.mrb[0].mxu0 %v521
    %v523 = vpop.f32.mrb[0].mxu0
    %v524 = vpop.f32.mrb[0].mxu0
    %v525 = vadd.f32 0.0, %v524
    %526 = vmatprep.mubr.f32.mxu0 0.0
    %v527 = vand.u32 %v156, 4294901760
    %v528 = vsub.f32 %v156, %v527
    %v529 = vand.u32 %v528, 4294901760
    %v530 = vsub.f32 %v528, %v529
    %v531 = vand.u32 %v530, 4294901760
    %532 = vmatmul.mubr.f32.gmra.mrb[0].mxu0 %v531
    %v533 = vpop.f32.mrb[0].mxu0
    %v534 = vpop.f32.mrb[0].mxu0
    %v535 = vadd.f32 0.0, %v534
    %536 = vmatprep.mubr.f32.mxu0 0.0
    %v537 = vand.u32 %v159, 4294901760
    %v538 = vsub.f32 %v159, %v537
    %v539 = vand.u32 %v538, 4294901760
    %v540 = vsub.f32 %v538, %v539
    %v541 = vand.u32 %v540, 4294901760
    %542 = vmatmul.mubr.f32.gmra.mrb[0].mxu0 %v541
    %v543 = vpop.f32.mrb[0].mxu0
    %v544 = vpop.f32.mrb[0].mxu0
    %v545 = vadd.f32 0.0, %v544
    %546 = vmatprep.mubr.f32.mxu0 0.0
    %v547 = vand.u32 %v162, 4294901760
    %v548 = vsub.f32 %v162, %v547
    %v549 = vand.u32 %v548, 4294901760
    %v550 = vsub.f32 %v548, %v549
    %v551 = vand.u32 %v550, 4294901760
    %552 = vmatmul.mubr.f32.gmra.mrb[0].mxu0 %v551
    %v553 = vpop.f32.mrb[0].mxu0
    %v554 = vpop.f32.mrb[0].mxu0
    %v555 = vadd.f32 0.0, %v554
    %556 = vmatprep.mubr.f32.mxu0 0.0
    %v557 = vand.u32 %v165, 4294901760
    %v558 = vsub.f32 %v165, %v557
    %v559 = vand.u32 %v558, 4294901760
    %v560 = vsub.f32 %v558, %v559
    %v561 = vand.u32 %v560, 4294901760
    %562 = vmatmul.mubr.f32.gmra.mrb[0].mxu0 %v561
    %v563 = vpop.f32.mrb[0].mxu0
    %v564 = vpop.f32.mrb[0].mxu0
    %565 = vmatprep.mubr.f32.mxu0 0.0
    %v566 = vand.u32 %v168, 4294901760
    %v567 = vsub.f32 %v168, %v566
    %v568 = vand.u32 %v567, 4294901760
    %v569 = vsub.f32 %v567, %v568
    %v570 = vand.u32 %v569, 4294901760
    %571 = vmatmul.mubr.f32.gmra.mrb[0].mxu0 %v570
    %v572 = vpop.f32.mrb[0].mxu0
    %v573 = vpop.f32.mrb[0].mxu0
    %574 = vmatprep.mubr.f32.mxu0 0.0
    %v575 = vand.u32 %v171, 4294901760
    %v576 = vsub.f32 %v171, %v575
    %v577 = vand.u32 %v576, 4294901760
    %v578 = vsub.f32 %v576, %v577
    %v579 = vand.u32 %v578, 4294901760
    %580 = vmatmul.mubr.f32.gmra.mrb[0].mxu0 %v579
    %v581 = vpop.f32.mrb[0].mxu0
    %v582 = vpop.f32.mrb[0].mxu0
    %583 = vdwg.mxu0
    %584 = vmatprep.subr.mxu0 0.0
    %v585 = vand.u32 %v78, 4294901760
    %v586 = vsub.f32 %v78, %v585
    %v587 = vand.u32 %v586, 4294901760
    %v588 = vsub.f32 %v586, %v587
    %v589 = vand.u32 %v588, 4294901760
    %590 = vmatpush1.xpose.msra.mxu0 %v589
    %591 = vmatprep.subr.mxu0 0.0
    %v592 = vand.u32 %v81, 4294901760
    %v593 = vsub.f32 %v81, %v592
    %v594 = vand.u32 %v593, 4294901760
    %v595 = vsub.f32 %v593, %v594
    %v596 = vand.u32 %v595, 4294901760
    %597 = vmatpush1.xpose.msra.mxu0 %v596
    %598 = vmatprep.subr.mxu0 0.0
    %v599 = vand.u32 %v84, 4294901760
    %v600 = vsub.f32 %v84, %v599
    %v601 = vand.u32 %v600, 4294901760
    %v602 = vsub.f32 %v600, %v601
    %v603 = vand.u32 %v602, 4294901760
    %604 = vmatpush1.xpose.msra.mxu0 %v603
    %605 = vmatprep.subr.mxu0 0.0
    %v606 = vand.u32 %v87, 4294901760
    %v607 = vsub.f32 %v87, %v606
    %v608 = vand.u32 %v607, 4294901760
    %v609 = vsub.f32 %v607, %v608
    %v610 = vand.u32 %v609, 4294901760
    %611 = vmatpush1.xpose.msra.mxu0 %v610
    %612 = vmatprep.subr.mxu0 0.0
    %v613 = vand.u32 %v90, 4294901760
    %v614 = vsub.f32 %v90, %v613
    %v615 = vand.u32 %v614, 4294901760
    %v616 = vsub.f32 %v614, %v615
    %v617 = vand.u32 %v616, 4294901760
    %618 = vmatpush1.xpose.msra.mxu0 %v617
    %619 = vmatprep.subr.mxu0 0.0
    %v620 = vand.u32 %v93, 4294901760
    %v621 = vsub.f32 %v93, %v620
    %v622 = vand.u32 %v621, 4294901760
    %v623 = vsub.f32 %v621, %v622
    %v624 = vand.u32 %v623, 4294901760
    %625 = vmatpush1.xpose.msra.mxu0 %v624
    %626 = vmatprep.subr.mxu0 0.0
    %v627 = vand.u32 %v96, 4294901760
    %v628 = vsub.f32 %v96, %v627
    %v629 = vand.u32 %v628, 4294901760
    %v630 = vsub.f32 %v628, %v629
    %v631 = vand.u32 %v630, 4294901760
    %632 = vmatpush1.xpose.msra.mxu0 %v631
    %633 = vmatprep.subr.mxu0 0.0
    %v634 = vand.u32 %v99, 4294901760
    %v635 = vsub.f32 %v99, %v634
    %v636 = vand.u32 %v635, 4294901760
    %v637 = vsub.f32 %v635, %v636
    %v638 = vand.u32 %v637, 4294901760
    %639 = vmatpush1.xpose.msra.mxu0 %v638
    %640 = vmatprep.subr.mxu0 0.0
    %v641 = vand.u32 %v102, 4294901760
    %v642 = vsub.f32 %v102, %v641
    %v643 = vand.u32 %v642, 4294901760
    %v644 = vsub.f32 %v642, %v643
    %v645 = vand.u32 %v644, 4294901760
    %646 = vmatpush1.xpose.msra.mxu0 %v645
    %647 = vmatprep.subr.mxu0 0.0
    %v648 = vand.u32 %v105, 4294901760
    %v649 = vsub.f32 %v105, %v648
    %v650 = vand.u32 %v649, 4294901760
    %v651 = vsub.f32 %v649, %v650
    %v652 = vand.u32 %v651, 4294901760
    %653 = vmatpush1.xpose.msra.mxu0 %v652
    %654 = vmatprep.subr.mxu0 0.0
    %v655 = vand.u32 %v108, 4294901760
    %v656 = vsub.f32 %v108, %v655
    %v657 = vand.u32 %v656, 4294901760
    %v658 = vsub.f32 %v656, %v657
    %v659 = vand.u32 %v658, 4294901760
    %660 = vmatpush1.xpose.msra.mxu0 %v659
    %661 = vmatprep.subr.mxu0 0.0
    %v662 = vand.u32 %v111, 4294901760
    %v663 = vsub.f32 %v111, %v662
    %v664 = vand.u32 %v663, 4294901760
    %v665 = vsub.f32 %v663, %v664
    %v666 = vand.u32 %v665, 4294901760
    %667 = vmatpush1.xpose.msra.mxu0 %v666
    %668 = vmatprep.subr.mxu0 0.0
    %v669 = vand.u32 %v114, 4294901760
    %v670 = vsub.f32 %v114, %v669
    %v671 = vand.u32 %v670, 4294901760
    %v672 = vsub.f32 %v670, %v671
    %v673 = vand.u32 %v672, 4294901760
    %674 = vmatpush1.xpose.msra.mxu0 %v673
    %675 = vmatprep.subr.mxu0 0.0
    %v676 = vand.u32 %v117, 4294901760
    %v677 = vsub.f32 %v117, %v676
    %v678 = vand.u32 %v677, 4294901760
    %v679 = vsub.f32 %v677, %v678
    %v680 = vand.u32 %v679, 4294901760
    %681 = vmatpush1.xpose.msra.mxu0 %v680
    %682 = vmatprep.subr.mxu0 0.0
    %v683 = vand.u32 %v120, 4294901760
    %v684 = vsub.f32 %v120, %v683
    %v685 = vand.u32 %v684, 4294901760
    %v686 = vsub.f32 %v684, %v685
    %v687 = vand.u32 %v686, 4294901760
    %688 = vmatpush1.xpose.msra.mxu0 %v687
    %689 = vmatprep.subr.mxu0 0.0
    %v690 = vand.u32 %v123, 4294901760
    %v691 = vsub.f32 %v123, %v690
    %v692 = vand.u32 %v691, 4294901760
    %v693 = vsub.f32 %v691, %v692
    %v694 = vand.u32 %v693, 4294901760
    %695 = vmatpush1.xpose.msra.mxu0 %v694
    %696 = vmatprep.subr.mxu0 0.0
    %v697 = vand.u32 %v126, 4294901760
    %v698 = vsub.f32 %v126, %v697
    %v699 = vand.u32 %v698, 4294901760
    %v700 = vsub.f32 %v698, %v699
    %v701 = vand.u32 %v700, 4294901760
    %702 = vmatpush1.xpose.msra.mxu0 %v701
    %703 = vmatprep.subr.mxu0 0.0
    %v704 = vand.u32 %v129, 4294901760
    %v705 = vsub.f32 %v129, %v704
    %v706 = vand.u32 %v705, 4294901760
    %v707 = vsub.f32 %v705, %v706
    %v708 = vand.u32 %v707, 4294901760
    %709 = vmatpush1.xpose.msra.mxu0 %v708
    %710 = vmatprep.subr.mxu0 0.0
    %v711 = vand.u32 %v132, 4294901760
    %v712 = vsub.f32 %v132, %v711
    %v713 = vand.u32 %v712, 4294901760
    %v714 = vsub.f32 %v712, %v713
    %v715 = vand.u32 %v714, 4294901760
    %716 = vmatpush1.xpose.msra.mxu0 %v715
    %717 = vmatprep.subr.mxu0 0.0
    %v718 = vand.u32 %v135, 4294901760
    %v719 = vsub.f32 %v135, %v718
    %v720 = vand.u32 %v719, 4294901760
    %v721 = vsub.f32 %v719, %v720
    %v722 = vand.u32 %v721, 4294901760
    %723 = vmatpush1.xpose.msra.mxu0 %v722
    %724 = vmatprep.subr.mxu0 0.0
    %v725 = vand.u32 %v138, 4294901760
    %v726 = vsub.f32 %v138, %v725
    %v727 = vand.u32 %v726, 4294901760
    %v728 = vsub.f32 %v726, %v727
    %v729 = vand.u32 %v728, 4294901760
    %730 = vmatpush1.xpose.msra.mxu0 %v729
    %731 = vmatprep.subr.mxu0 0.0
    %v732 = vand.u32 %v141, 4294901760
    %v733 = vsub.f32 %v141, %v732
    %v734 = vand.u32 %v733, 4294901760
    %v735 = vsub.f32 %v733, %v734
    %v736 = vand.u32 %v735, 4294901760
    %737 = vmatpush1.xpose.msra.mxu0 %v736
    %738 = vmatprep.subr.mxu0 0.0
    %v739 = vand.u32 %v144, 4294901760
    %v740 = vsub.f32 %v144, %v739
    %v741 = vand.u32 %v740, 4294901760
    %v742 = vsub.f32 %v740, %v741
    %v743 = vand.u32 %v742, 4294901760
    %744 = vmatpush1.xpose.msra.mxu0 %v743
    %745 = vmatprep.subr.mxu0 0.0
    %v746 = vand.u32 %v147, 4294901760
    %v747 = vsub.f32 %v147, %v746
    %v748 = vand.u32 %v747, 4294901760
    %v749 = vsub.f32 %v747, %v748
    %v750 = vand.u32 %v749, 4294901760
    %751 = vmatpush1.xpose.msra.mxu0 %v750
    %752 = vmatprep.subr.mxu0 0.0
    %v753 = vand.u32 %v150, 4294901760
    %v754 = vsub.f32 %v150, %v753
    %v755 = vand.u32 %v754, 4294901760
    %v756 = vsub.f32 %v754, %v755
    %v757 = vand.u32 %v756, 4294901760
    %758 = vmatpush1.xpose.msra.mxu0 %v757
    %759 = vmatprep.subr.mxu0 0.0
    %v760 = vand.u32 %v153, 4294901760
    %v761 = vsub.f32 %v153, %v760
    %v762 = vand.u32 %v761, 4294901760
    %v763 = vsub.f32 %v761, %v762
    %v764 = vand.u32 %v763, 4294901760
    %765 = vmatpush1.xpose.msra.mxu0 %v764
    %766 = vmatprep.subr.mxu0 0.0
    %v767 = vand.u32 %v156, 4294901760
    %v768 = vsub.f32 %v156, %v767
    %v769 = vand.u32 %v768, 4294901760
    %v770 = vsub.f32 %v768, %v769
    %v771 = vand.u32 %v770, 4294901760
    %772 = vmatpush1.xpose.msra.mxu0 %v771
    %773 = vmatprep.subr.mxu0 0.0
    %v774 = vand.u32 %v159, 4294901760
    %v775 = vsub.f32 %v159, %v774
    %v776 = vand.u32 %v775, 4294901760
    %v777 = vsub.f32 %v775, %v776
    %v778 = vand.u32 %v777, 4294901760
    %779 = vmatpush1.xpose.msra.mxu0 %v778
    %780 = vmatprep.subr.mxu0 0.0
    %v781 = vand.u32 %v162, 4294901760
    %v782 = vsub.f32 %v162, %v781
    %v783 = vand.u32 %v782, 4294901760
    %v784 = vsub.f32 %v782, %v783
    %v785 = vand.u32 %v784, 4294901760
    %786 = vmatpush1.xpose.msra.mxu0 %v785
    %787 = vmatprep.subr.mxu0 0.0
    %v788 = vand.u32 %v165, 4294901760
    %v789 = vsub.f32 %v165, %v788
    %v790 = vand.u32 %v789, 4294901760
    %v791 = vsub.f32 %v789, %v790
    %v792 = vand.u32 %v791, 4294901760
    %793 = vmatpush1.xpose.msra.mxu0 %v792
    %794 = vmatprep.subr.mxu0 0.0
    %v795 = vand.u32 %v168, 4294901760
    %v796 = vsub.f32 %v168, %v795
    %v797 = vand.u32 %v796, 4294901760
    %v798 = vsub.f32 %v796, %v797
    %v799 = vand.u32 %v798, 4294901760
    %800 = vmatpush1.xpose.msra.mxu0 %v799
    %801 = vmatprep.subr.mxu0 0.0
    %v802 = vand.u32 %v171, 4294901760
    %v803 = vsub.f32 %v171, %v802
    %v804 = vand.u32 %v803, 4294901760
    %v805 = vsub.f32 %v803, %v804
    %v806 = vand.u32 %v805, 4294901760
    %807 = vmatpush1.xpose.msra.mxu0 %v806
    %808 = vmatprep.mubr.f32.mxu0 0.0
    %v809 = vand.u32 %v78, 4294901760
    %810 = vmatmul.mubr.f32.gmra.mrb[0].mxu0 %v809
    %v811 = vpop.f32.mrb[0].mxu0
    %v812 = vadd.f32 %v277, %v811
    %v813 = vpop.f32.mrb[0].mxu0
    %814 = vmatprep.mubr.f32.mxu0 0.0
    %v815 = vand.u32 %v81, 4294901760
    %816 = vmatmul.mubr.f32.gmra.mrb[0].mxu0 %v815
    %v817 = vpop.f32.mrb[0].mxu0
    %v818 = vadd.f32 %v287, %v817
    %v819 = vpop.f32.mrb[0].mxu0
    %820 = vmatprep.mubr.f32.mxu0 0.0
    %v821 = vand.u32 %v84, 4294901760
    %822 = vmatmul.mubr.f32.gmra.mrb[0].mxu0 %v821
    %v823 = vpop.f32.mrb[0].mxu0
    %v824 = vadd.f32 %v297, %v823
    %v825 = vpop.f32.mrb[0].mxu0
    %826 = vmatprep.mubr.f32.mxu0 0.0
    %v827 = vand.u32 %v87, 4294901760
    %828 = vmatmul.mubr.f32.gmra.mrb[0].mxu0 %v827
    %v829 = vpop.f32.mrb[0].mxu0
    %v830 = vadd.f32 %v307, %v829
    %v831 = vpop.f32.mrb[0].mxu0
    %832 = vmatprep.mubr.f32.mxu0 0.0
    %v833 = vand.u32 %v90, 4294901760
    %834 = vmatmul.mubr.f32.gmra.mrb[0].mxu0 %v833
    %v835 = vpop.f32.mrb[0].mxu0
    %v836 = vadd.f32 %v317, %v835
    %v837 = vpop.f32.mrb[0].mxu0
    %838 = vmatprep.mubr.f32.mxu0 0.0
    %v839 = vand.u32 %v93, 4294901760
    %840 = vmatmul.mubr.f32.gmra.mrb[0].mxu0 %v839
    %v841 = vpop.f32.mrb[0].mxu0
    %v842 = vadd.f32 %v327, %v841
    %v843 = vpop.f32.mrb[0].mxu0
    %844 = vmatprep.mubr.f32.mxu0 0.0
    %v845 = vand.u32 %v96, 4294901760
    %846 = vmatmul.mubr.f32.gmra.mrb[0].mxu0 %v845
    %v847 = vpop.f32.mrb[0].mxu0
    %v848 = vadd.f32 %v337, %v847
    %v849 = vpop.f32.mrb[0].mxu0
    %850 = vmatprep.mubr.f32.mxu0 0.0
    %v851 = vand.u32 %v99, 4294901760
    %852 = vmatmul.mubr.f32.gmra.mrb[0].mxu0 %v851
    %v853 = vpop.f32.mrb[0].mxu0
    %v854 = vadd.f32 %v347, %v853
    %v855 = vpop.f32.mrb[0].mxu0
    %856 = vmatprep.mubr.f32.mxu0 0.0
    %v857 = vand.u32 %v102, 4294901760
    %858 = vmatmul.mubr.f32.gmra.mrb[0].mxu0 %v857
    %v859 = vpop.f32.mrb[0].mxu0
    %v860 = vadd.f32 %v357, %v859
    %v861 = vpop.f32.mrb[0].mxu0
    %862 = vmatprep.mubr.f32.mxu0 0.0
    %v863 = vand.u32 %v105, 4294901760
    %864 = vmatmul.mubr.f32.gmra.mrb[0].mxu0 %v863
    %v865 = vpop.f32.mrb[0].mxu0
    %v866 = vadd.f32 %v367, %v865
    %v867 = vpop.f32.mrb[0].mxu0
    %868 = vmatprep.mubr.f32.mxu0 0.0
    %v869 = vand.u32 %v108, 4294901760
    %870 = vmatmul.mubr.f32.gmra.mrb[0].mxu0 %v869
    %v871 = vpop.f32.mrb[0].mxu0
    %v872 = vadd.f32 %v377, %v871
    %v873 = vpop.f32.mrb[0].mxu0
    %874 = vmatprep.mubr.f32.mxu0 0.0
    %v875 = vand.u32 %v111, 4294901760
    %876 = vmatmul.mubr.f32.gmra.mrb[0].mxu0 %v875
    %v877 = vpop.f32.mrb[0].mxu0
    %v878 = vadd.f32 %v387, %v877
    %v879 = vpop.f32.mrb[0].mxu0
    %880 = vmatprep.mubr.f32.mxu0 0.0
    %v881 = vand.u32 %v114, 4294901760
    %882 = vmatmul.mubr.f32.gmra.mrb[0].mxu0 %v881
    %v883 = vpop.f32.mrb[0].mxu0
    %v884 = vadd.f32 %v397, %v883
    %v885 = vpop.f32.mrb[0].mxu0
    %886 = vmatprep.mubr.f32.mxu0 0.0
    %v887 = vand.u32 %v117, 4294901760
    %888 = vmatmul.mubr.f32.gmra.mrb[0].mxu0 %v887
    %v889 = vpop.f32.mrb[0].mxu0
    %v890 = vpop.f32.mrb[0].mxu0
    %891 = vmatprep.mubr.f32.mxu0 0.0
    %v892 = vand.u32 %v120, 4294901760
    %893 = vmatmul.mubr.f32.gmra.mrb[0].mxu0 %v892
    %v894 = vpop.f32.mrb[0].mxu0
    %v895 = vpop.f32.mrb[0].mxu0
    %896 = vmatprep.mubr.f32.mxu0 0.0
    %v897 = vand.u32 %v123, 4294901760
    %898 = vmatmul.mubr.f32.gmra.mrb[0].mxu0 %v897
    %v899 = vpop.f32.mrb[0].mxu0
    %v900 = vpop.f32.mrb[0].mxu0
    %901 = vmatprep.mubr.f32.mxu0 0.0
    %v902 = vand.u32 %v126, 4294901760
    %903 = vmatmul.mubr.f32.gmra.mrb[0].mxu0 %v902
    %v904 = vpop.f32.mrb[0].mxu0
    %v905 = vpop.f32.mrb[0].mxu0
    %v906 = vadd.f32 %v435, %v905
    %907 = vmatprep.mubr.f32.mxu0 0.0
    %v908 = vand.u32 %v129, 4294901760
    %909 = vmatmul.mubr.f32.gmra.mrb[0].mxu0 %v908
    %v910 = vpop.f32.mrb[0].mxu0
    %v911 = vpop.f32.mrb[0].mxu0
    %v912 = vadd.f32 %v445, %v911
    %913 = vmatprep.mubr.f32.mxu0 0.0
    %v914 = vand.u32 %v132, 4294901760
    %915 = vmatmul.mubr.f32.gmra.mrb[0].mxu0 %v914
    %v916 = vpop.f32.mrb[0].mxu0
    %v917 = vpop.f32.mrb[0].mxu0
    %v918 = vadd.f32 %v455, %v917
    %919 = vmatprep.mubr.f32.mxu0 0.0
    %v920 = vand.u32 %v135, 4294901760
    %921 = vmatmul.mubr.f32.gmra.mrb[0].mxu0 %v920
    %v922 = vpop.f32.mrb[0].mxu0
    %v923 = vpop.f32.mrb[0].mxu0
    %v924 = vadd.f32 %v465, %v923
    %925 = vmatprep.mubr.f32.mxu0 0.0
    %v926 = vand.u32 %v138, 4294901760
    %927 = vmatmul.mubr.f32.gmra.mrb[0].mxu0 %v926
    %v928 = vpop.f32.mrb[0].mxu0
    %v929 = vpop.f32.mrb[0].mxu0
    %v930 = vadd.f32 %v475, %v929
    %931 = vmatprep.mubr.f32.mxu0 0.0
    %v932 = vand.u32 %v141, 4294901760
    %933 = vmatmul.mubr.f32.gmra.mrb[0].mxu0 %v932
    %v934 = vpop.f32.mrb[0].mxu0
    %v935 = vpop.f32.mrb[0].mxu0
    %v936 = vadd.f32 %v485, %v935
    %937 = vmatprep.mubr.f32.mxu0 0.0
    %v938 = vand.u32 %v144, 4294901760
    %939 = vmatmul.mubr.f32.gmra.mrb[0].mxu0 %v938
    %v940 = vpop.f32.mrb[0].mxu0
    %v941 = vpop.f32.mrb[0].mxu0
    %v942 = vadd.f32 %v495, %v941
    %943 = vmatprep.mubr.f32.mxu0 0.0
    %v944 = vand.u32 %v147, 4294901760
    %945 = vmatmul.mubr.f32.gmra.mrb[0].mxu0 %v944
    %v946 = vpop.f32.mrb[0].mxu0
    %v947 = vpop.f32.mrb[0].mxu0
    %v948 = vadd.f32 %v505, %v947
    %949 = vmatprep.mubr.f32.mxu0 0.0
    %v950 = vand.u32 %v150, 4294901760
    %951 = vmatmul.mubr.f32.gmra.mrb[0].mxu0 %v950
    %v952 = vpop.f32.mrb[0].mxu0
    %v953 = vpop.f32.mrb[0].mxu0
    %v954 = vadd.f32 %v515, %v953
    %955 = vmatprep.mubr.f32.mxu0 0.0
    %v956 = vand.u32 %v153, 4294901760
    %957 = vmatmul.mubr.f32.gmra.mrb[0].mxu0 %v956
    %v958 = vpop.f32.mrb[0].mxu0
    %v959 = vpop.f32.mrb[0].mxu0
    %v960 = vadd.f32 %v525, %v959
    %961 = vmatprep.mubr.f32.mxu0 0.0
    %v962 = vand.u32 %v156, 4294901760
    %963 = vmatmul.mubr.f32.gmra.mrb[0].mxu0 %v962
    %v964 = vpop.f32.mrb[0].mxu0
    %v965 = vpop.f32.mrb[0].mxu0
    %v966 = vadd.f32 %v535, %v965
    %967 = vmatprep.mubr.f32.mxu0 0.0
    %v968 = vand.u32 %v159, 4294901760
    %969 = vmatmul.mubr.f32.gmra.mrb[0].mxu0 %v968
    %v970 = vpop.f32.mrb[0].mxu0
    %v971 = vpop.f32.mrb[0].mxu0
    %v972 = vadd.f32 %v545, %v971
    %973 = vmatprep.mubr.f32.mxu0 0.0
    %v974 = vand.u32 %v162, 4294901760
    %975 = vmatmul.mubr.f32.gmra.mrb[0].mxu0 %v974
    %v976 = vpop.f32.mrb[0].mxu0
    %v977 = vpop.f32.mrb[0].mxu0
    %v978 = vadd.f32 %v555, %v977
    %979 = vmatprep.mubr.f32.mxu0 0.0
    %v980 = vand.u32 %v165, 4294901760
    %981 = vmatmul.mubr.f32.gmra.mrb[0].mxu0 %v980
    %v982 = vpop.f32.mrb[0].mxu0
    %v983 = vpop.f32.mrb[0].mxu0
    %984 = vmatprep.mubr.f32.mxu0 0.0
    %v985 = vand.u32 %v168, 4294901760
    %986 = vmatmul.mubr.f32.gmra.mrb[0].mxu0 %v985
    %v987 = vpop.f32.mrb[0].mxu0
    %v988 = vpop.f32.mrb[0].mxu0
    %989 = vmatprep.mubr.f32.mxu0 0.0
    %v990 = vand.u32 %v171, 4294901760
    %991 = vmatmul.mubr.f32.gmra.mrb[0].mxu0 %v990
    %v992 = vpop.f32.mrb[0].mxu0
    %v993 = vpop.f32.mrb[0].mxu0
    %994 = vdwg.mxu0
    %995 = vmatprep.subr.mxu0 0.0
    %v996 = vand.u32 %v78, 4294901760
    %v997 = vsub.f32 %v78, %v996
    %998 = vmatpush1.xpose.msra.mxu0 %v997
    %999 = vmatprep.subr.mxu0 0.0
    %v1000 = vand.u32 %v81, 4294901760
    %v1001 = vsub.f32 %v81, %v1000
    %1002 = vmatpush1.xpose.msra.mxu0 %v1001
    %1003 = vmatprep.subr.mxu0 0.0
    %v1004 = vand.u32 %v84, 4294901760
    %v1005 = vsub.f32 %v84, %v1004
    %1006 = vmatpush1.xpose.msra.mxu0 %v1005
    %1007 = vmatprep.subr.mxu0 0.0
    %v1008 = vand.u32 %v87, 4294901760
    %v1009 = vsub.f32 %v87, %v1008
    %1010 = vmatpush1.xpose.msra.mxu0 %v1009
    %1011 = vmatprep.subr.mxu0 0.0
    %v1012 = vand.u32 %v90, 4294901760
    %v1013 = vsub.f32 %v90, %v1012
    %1014 = vmatpush1.xpose.msra.mxu0 %v1013
    %1015 = vmatprep.subr.mxu0 0.0
    %v1016 = vand.u32 %v93, 4294901760
    %v1017 = vsub.f32 %v93, %v1016
    %1018 = vmatpush1.xpose.msra.mxu0 %v1017
    %1019 = vmatprep.subr.mxu0 0.0
    %v1020 = vand.u32 %v96, 4294901760
    %v1021 = vsub.f32 %v96, %v1020
    %1022 = vmatpush1.xpose.msra.mxu0 %v1021
    %1023 = vmatprep.subr.mxu0 0.0
    %v1024 = vand.u32 %v99, 4294901760
    %v1025 = vsub.f32 %v99, %v1024
    %1026 = vmatpush1.xpose.msra.mxu0 %v1025
    %1027 = vmatprep.subr.mxu0 0.0
    %v1028 = vand.u32 %v102, 4294901760
    %v1029 = vsub.f32 %v102, %v1028
    %1030 = vmatpush1.xpose.msra.mxu0 %v1029
    %1031 = vmatprep.subr.mxu0 0.0
    %v1032 = vand.u32 %v105, 4294901760
    %v1033 = vsub.f32 %v105, %v1032
    %1034 = vmatpush1.xpose.msra.mxu0 %v1033
    %1035 = vmatprep.subr.mxu0 0.0
    %v1036 = vand.u32 %v108, 4294901760
    %v1037 = vsub.f32 %v108, %v1036
    %1038 = vmatpush1.xpose.msra.mxu0 %v1037
    %1039 = vmatprep.subr.mxu0 0.0
    %v1040 = vand.u32 %v111, 4294901760
    %v1041 = vsub.f32 %v111, %v1040
    %1042 = vmatpush1.xpose.msra.mxu0 %v1041
    %1043 = vmatprep.subr.mxu0 0.0
    %v1044 = vand.u32 %v114, 4294901760
    %v1045 = vsub.f32 %v114, %v1044
    %1046 = vmatpush1.xpose.msra.mxu0 %v1045
    %1047 = vmatprep.subr.mxu0 0.0
    %v1048 = vand.u32 %v117, 4294901760
    %v1049 = vsub.f32 %v117, %v1048
    %1050 = vmatpush1.xpose.msra.mxu0 %v1049
    %1051 = vmatprep.subr.mxu0 0.0
    %v1052 = vand.u32 %v120, 4294901760
    %v1053 = vsub.f32 %v120, %v1052
    %1054 = vmatpush1.xpose.msra.mxu0 %v1053
    %1055 = vmatprep.subr.mxu0 0.0
    %v1056 = vand.u32 %v123, 4294901760
    %v1057 = vsub.f32 %v123, %v1056
    %1058 = vmatpush1.xpose.msra.mxu0 %v1057
    %1059 = vmatprep.subr.mxu0 0.0
    %v1060 = vand.u32 %v126, 4294901760
    %v1061 = vsub.f32 %v126, %v1060
    %1062 = vmatpush1.xpose.msra.mxu0 %v1061
    %1063 = vmatprep.subr.mxu0 0.0
    %v1064 = vand.u32 %v129, 4294901760
    %v1065 = vsub.f32 %v129, %v1064
    %1066 = vmatpush1.xpose.msra.mxu0 %v1065
    %1067 = vmatprep.subr.mxu0 0.0
    %v1068 = vand.u32 %v132, 4294901760
    %v1069 = vsub.f32 %v132, %v1068
    %1070 = vmatpush1.xpose.msra.mxu0 %v1069
    %1071 = vmatprep.subr.mxu0 0.0
    %v1072 = vand.u32 %v135, 4294901760
    %v1073 = vsub.f32 %v135, %v1072
    %1074 = vmatpush1.xpose.msra.mxu0 %v1073
    %1075 = vmatprep.subr.mxu0 0.0
    %v1076 = vand.u32 %v138, 4294901760
    %v1077 = vsub.f32 %v138, %v1076
    %1078 = vmatpush1.xpose.msra.mxu0 %v1077
    %1079 = vmatprep.subr.mxu0 0.0
    %v1080 = vand.u32 %v141, 4294901760
    %v1081 = vsub.f32 %v141, %v1080
    %1082 = vmatpush1.xpose.msra.mxu0 %v1081
    %1083 = vmatprep.subr.mxu0 0.0
    %v1084 = vand.u32 %v144, 4294901760
    %v1085 = vsub.f32 %v144, %v1084
    %1086 = vmatpush1.xpose.msra.mxu0 %v1085
    %1087 = vmatprep.subr.mxu0 0.0
    %v1088 = vand.u32 %v147, 4294901760
    %v1089 = vsub.f32 %v147, %v1088
    %1090 = vmatpush1.xpose.msra.mxu0 %v1089
    %1091 = vmatprep.subr.mxu0 0.0
    %v1092 = vand.u32 %v150, 4294901760
    %v1093 = vsub.f32 %v150, %v1092
    %1094 = vmatpush1.xpose.msra.mxu0 %v1093
    %1095 = vmatprep.subr.mxu0 0.0
    %v1096 = vand.u32 %v153, 4294901760
    %v1097 = vsub.f32 %v153, %v1096
    %1098 = vmatpush1.xpose.msra.mxu0 %v1097
    %1099 = vmatprep.subr.mxu0 0.0
    %v1100 = vand.u32 %v156, 4294901760
    %v1101 = vsub.f32 %v156, %v1100
    %1102 = vmatpush1.xpose.msra.mxu0 %v1101
    %1103 = vmatprep.subr.mxu0 0.0
    %v1104 = vand.u32 %v159, 4294901760
    %v1105 = vsub.f32 %v159, %v1104
    %1106 = vmatpush1.xpose.msra.mxu0 %v1105
    %1107 = vmatprep.subr.mxu0 0.0
    %v1108 = vand.u32 %v162, 4294901760
    %v1109 = vsub.f32 %v162, %v1108
    %1110 = vmatpush1.xpose.msra.mxu0 %v1109
    %1111 = vmatprep.subr.mxu0 0.0
    %v1112 = vand.u32 %v165, 4294901760
    %v1113 = vsub.f32 %v165, %v1112
    %1114 = vmatpush1.xpose.msra.mxu0 %v1113
    %1115 = vmatprep.subr.mxu0 0.0
    %v1116 = vand.u32 %v168, 4294901760
    %v1117 = vsub.f32 %v168, %v1116
    %1118 = vmatpush1.xpose.msra.mxu0 %v1117
    %1119 = vmatprep.subr.mxu0 0.0
    %v1120 = vand.u32 %v171, 4294901760
    %v1121 = vsub.f32 %v171, %v1120
    %1122 = vmatpush1.xpose.msra.mxu0 %v1121
    %1123 = vmatprep.mubr.f32.mxu0 0.0
    %v1124 = vand.u32 %v78, 4294901760
    %v1125 = vsub.f32 %v78, %v1124
    %1126 = vmatmul.mubr.f32.gmra.mrb[0].mxu0 %v1125
    %v1127 = vpop.f32.mrb[0].mxu0
    %v1128 = vadd.f32 %v812, %v1127
    %v1129 = vpop.f32.mrb[0].mxu0
    %1130 = vmatprep.mubr.f32.mxu0 0.0
    %v1131 = vand.u32 %v81, 4294901760
    %v1132 = vsub.f32 %v81, %v1131
    %1133 = vmatmul.mubr.f32.gmra.mrb[0].mxu0 %v1132
    %v1134 = vpop.f32.mrb[0].mxu0
    %v1135 = vadd.f32 %v818, %v1134
    %v1136 = vpop.f32.mrb[0].mxu0
    %1137 = vmatprep.mubr.f32.mxu0 0.0
    %v1138 = vand.u32 %v84, 4294901760
    %v1139 = vsub.f32 %v84, %v1138
    %1140 = vmatmul.mubr.f32.gmra.mrb[0].mxu0 %v1139
    %v1141 = vpop.f32.mrb[0].mxu0
    %v1142 = vadd.f32 %v824, %v1141
    %v1143 = vpop.f32.mrb[0].mxu0
    %1144 = vmatprep.mubr.f32.mxu0 0.0
    %v1145 = vand.u32 %v87, 4294901760
    %v1146 = vsub.f32 %v87, %v1145
    %1147 = vmatmul.mubr.f32.gmra.mrb[0].mxu0 %v1146
    %v1148 = vpop.f32.mrb[0].mxu0
    %v1149 = vadd.f32 %v830, %v1148
    %v1150 = vpop.f32.mrb[0].mxu0
    %1151 = vmatprep.mubr.f32.mxu0 0.0
    %v1152 = vand.u32 %v90, 4294901760
    %v1153 = vsub.f32 %v90, %v1152
    %1154 = vmatmul.mubr.f32.gmra.mrb[0].mxu0 %v1153
    %v1155 = vpop.f32.mrb[0].mxu0
    %v1156 = vadd.f32 %v836, %v1155
    %v1157 = vpop.f32.mrb[0].mxu0
    %1158 = vmatprep.mubr.f32.mxu0 0.0
    %v1159 = vand.u32 %v93, 4294901760
    %v1160 = vsub.f32 %v93, %v1159
    %1161 = vmatmul.mubr.f32.gmra.mrb[0].mxu0 %v1160
    %v1162 = vpop.f32.mrb[0].mxu0
    %v1163 = vadd.f32 %v842, %v1162
    %v1164 = vpop.f32.mrb[0].mxu0
    %1165 = vmatprep.mubr.f32.mxu0 0.0
    %v1166 = vand.u32 %v96, 4294901760
    %v1167 = vsub.f32 %v96, %v1166
    %1168 = vmatmul.mubr.f32.gmra.mrb[0].mxu0 %v1167
    %v1169 = vpop.f32.mrb[0].mxu0
    %v1170 = vadd.f32 %v848, %v1169
    %v1171 = vpop.f32.mrb[0].mxu0
    %1172 = vmatprep.mubr.f32.mxu0 0.0
    %v1173 = vand.u32 %v99, 4294901760
    %v1174 = vsub.f32 %v99, %v1173
    %1175 = vmatmul.mubr.f32.gmra.mrb[0].mxu0 %v1174
    %v1176 = vpop.f32.mrb[0].mxu0
    %v1177 = vadd.f32 %v854, %v1176
    %v1178 = vpop.f32.mrb[0].mxu0
    %1179 = vmatprep.mubr.f32.mxu0 0.0
    %v1180 = vand.u32 %v102, 4294901760
    %v1181 = vsub.f32 %v102, %v1180
    %1182 = vmatmul.mubr.f32.gmra.mrb[0].mxu0 %v1181
    %v1183 = vpop.f32.mrb[0].mxu0
    %v1184 = vadd.f32 %v860, %v1183
    %v1185 = vpop.f32.mrb[0].mxu0
    %1186 = vmatprep.mubr.f32.mxu0 0.0
    %v1187 = vand.u32 %v105, 4294901760
    %v1188 = vsub.f32 %v105, %v1187
    %1189 = vmatmul.mubr.f32.gmra.mrb[0].mxu0 %v1188
    %v1190 = vpop.f32.mrb[0].mxu0
    %v1191 = vadd.f32 %v866, %v1190
    %v1192 = vpop.f32.mrb[0].mxu0
    %1193 = vmatprep.mubr.f32.mxu0 0.0
    %v1194 = vand.u32 %v108, 4294901760
    %v1195 = vsub.f32 %v108, %v1194
    %1196 = vmatmul.mubr.f32.gmra.mrb[0].mxu0 %v1195
    %v1197 = vpop.f32.mrb[0].mxu0
    %v1198 = vadd.f32 %v872, %v1197
    %v1199 = vpop.f32.mrb[0].mxu0
    %1200 = vmatprep.mubr.f32.mxu0 0.0
    %v1201 = vand.u32 %v111, 4294901760
    %v1202 = vsub.f32 %v111, %v1201
    %1203 = vmatmul.mubr.f32.gmra.mrb[0].mxu0 %v1202
    %v1204 = vpop.f32.mrb[0].mxu0
    %v1205 = vadd.f32 %v878, %v1204
    %v1206 = vpop.f32.mrb[0].mxu0
    %1207 = vmatprep.mubr.f32.mxu0 0.0
    %v1208 = vand.u32 %v114, 4294901760
    %v1209 = vsub.f32 %v114, %v1208
    %1210 = vmatmul.mubr.f32.gmra.mrb[0].mxu0 %v1209
    %v1211 = vpop.f32.mrb[0].mxu0
    %v1212 = vadd.f32 %v884, %v1211
    %v1213 = vpop.f32.mrb[0].mxu0
    %1214 = vmatprep.mubr.f32.mxu0 0.0
    %v1215 = vand.u32 %v117, 4294901760
    %v1216 = vsub.f32 %v117, %v1215
    %1217 = vmatmul.mubr.f32.gmra.mrb[0].mxu0 %v1216
    %v1218 = vpop.f32.mrb[0].mxu0
    %v1219 = vpop.f32.mrb[0].mxu0
    %1220 = vmatprep.mubr.f32.mxu0 0.0
    %v1221 = vand.u32 %v120, 4294901760
    %v1222 = vsub.f32 %v120, %v1221
    %1223 = vmatmul.mubr.f32.gmra.mrb[0].mxu0 %v1222
    %v1224 = vpop.f32.mrb[0].mxu0
    %v1225 = vpop.f32.mrb[0].mxu0
    %1226 = vmatprep.mubr.f32.mxu0 0.0
    %v1227 = vand.u32 %v123, 4294901760
    %v1228 = vsub.f32 %v123, %v1227
    %1229 = vmatmul.mubr.f32.gmra.mrb[0].mxu0 %v1228
    %v1230 = vpop.f32.mrb[0].mxu0
    %v1231 = vpop.f32.mrb[0].mxu0
    %1232 = vmatprep.mubr.f32.mxu0 0.0
    %v1233 = vand.u32 %v126, 4294901760
    %v1234 = vsub.f32 %v126, %v1233
    %1235 = vmatmul.mubr.f32.gmra.mrb[0].mxu0 %v1234
    %v1236 = vpop.f32.mrb[0].mxu0
    %v1237 = vpop.f32.mrb[0].mxu0
    %v1238 = vadd.f32 %v906, %v1237
    %1239 = vmatprep.mubr.f32.mxu0 0.0
    %v1240 = vand.u32 %v129, 4294901760
    %v1241 = vsub.f32 %v129, %v1240
    %1242 = vmatmul.mubr.f32.gmra.mrb[0].mxu0 %v1241
    %v1243 = vpop.f32.mrb[0].mxu0
    %v1244 = vpop.f32.mrb[0].mxu0
    %v1245 = vadd.f32 %v912, %v1244
    %1246 = vmatprep.mubr.f32.mxu0 0.0
    %v1247 = vand.u32 %v132, 4294901760
    %v1248 = vsub.f32 %v132, %v1247
    %1249 = vmatmul.mubr.f32.gmra.mrb[0].mxu0 %v1248
    %v1250 = vpop.f32.mrb[0].mxu0
    %v1251 = vpop.f32.mrb[0].mxu0
    %v1252 = vadd.f32 %v918, %v1251
    %1253 = vmatprep.mubr.f32.mxu0 0.0
    %v1254 = vand.u32 %v135, 4294901760
    %v1255 = vsub.f32 %v135, %v1254
    %1256 = vmatmul.mubr.f32.gmra.mrb[0].mxu0 %v1255
    %v1257 = vpop.f32.mrb[0].mxu0
    %v1258 = vpop.f32.mrb[0].mxu0
    %v1259 = vadd.f32 %v924, %v1258
    %1260 = vmatprep.mubr.f32.mxu0 0.0
    %v1261 = vand.u32 %v138, 4294901760
    %v1262 = vsub.f32 %v138, %v1261
    %1263 = vmatmul.mubr.f32.gmra.mrb[0].mxu0 %v1262
    %v1264 = vpop.f32.mrb[0].mxu0
    %v1265 = vpop.f32.mrb[0].mxu0
    %v1266 = vadd.f32 %v930, %v1265
    %1267 = vmatprep.mubr.f32.mxu0 0.0
    %v1268 = vand.u32 %v141, 4294901760
    %v1269 = vsub.f32 %v141, %v1268
    %1270 = vmatmul.mubr.f32.gmra.mrb[0].mxu0 %v1269
    %v1271 = vpop.f32.mrb[0].mxu0
    %v1272 = vpop.f32.mrb[0].mxu0
    %v1273 = vadd.f32 %v936, %v1272
    %1274 = vmatprep.mubr.f32.mxu0 0.0
    %v1275 = vand.u32 %v144, 4294901760
    %v1276 = vsub.f32 %v144, %v1275
    %1277 = vmatmul.mubr.f32.gmra.mrb[0].mxu0 %v1276
    %v1278 = vpop.f32.mrb[0].mxu0
    %v1279 = vpop.f32.mrb[0].mxu0
    %v1280 = vadd.f32 %v942, %v1279
    %1281 = vmatprep.mubr.f32.mxu0 0.0
    %v1282 = vand.u32 %v147, 4294901760
    %v1283 = vsub.f32 %v147, %v1282
    %1284 = vmatmul.mubr.f32.gmra.mrb[0].mxu0 %v1283
    %v1285 = vpop.f32.mrb[0].mxu0
    %v1286 = vpop.f32.mrb[0].mxu0
    %v1287 = vadd.f32 %v948, %v1286
    %1288 = vmatprep.mubr.f32.mxu0 0.0
    %v1289 = vand.u32 %v150, 4294901760
    %v1290 = vsub.f32 %v150, %v1289
    %1291 = vmatmul.mubr.f32.gmra.mrb[0].mxu0 %v1290
    %v1292 = vpop.f32.mrb[0].mxu0
    %v1293 = vpop.f32.mrb[0].mxu0
    %v1294 = vadd.f32 %v954, %v1293
    %1295 = vmatprep.mubr.f32.mxu0 0.0
    %v1296 = vand.u32 %v153, 4294901760
    %v1297 = vsub.f32 %v153, %v1296
    %1298 = vmatmul.mubr.f32.gmra.mrb[0].mxu0 %v1297
    %v1299 = vpop.f32.mrb[0].mxu0
    %v1300 = vpop.f32.mrb[0].mxu0
    %v1301 = vadd.f32 %v960, %v1300
    %1302 = vmatprep.mubr.f32.mxu0 0.0
    %v1303 = vand.u32 %v156, 4294901760
    %v1304 = vsub.f32 %v156, %v1303
    %1305 = vmatmul.mubr.f32.gmra.mrb[0].mxu0 %v1304
    %v1306 = vpop.f32.mrb[0].mxu0
    %v1307 = vpop.f32.mrb[0].mxu0
    %v1308 = vadd.f32 %v966, %v1307
    %1309 = vmatprep.mubr.f32.mxu0 0.0
    %v1310 = vand.u32 %v159, 4294901760
    %v1311 = vsub.f32 %v159, %v1310
    %1312 = vmatmul.mubr.f32.gmra.mrb[0].mxu0 %v1311
    %v1313 = vpop.f32.mrb[0].mxu0
    %v1314 = vpop.f32.mrb[0].mxu0
    %v1315 = vadd.f32 %v972, %v1314
    %1316 = vmatprep.mubr.f32.mxu0 0.0
    %v1317 = vand.u32 %v162, 4294901760
    %v1318 = vsub.f32 %v162, %v1317
    %1319 = vmatmul.mubr.f32.gmra.mrb[0].mxu0 %v1318
    %v1320 = vpop.f32.mrb[0].mxu0
    %v1321 = vpop.f32.mrb[0].mxu0
    %v1322 = vadd.f32 %v978, %v1321
    %1323 = vmatprep.mubr.f32.mxu0 0.0
    %v1324 = vand.u32 %v165, 4294901760
    %v1325 = vsub.f32 %v165, %v1324
    %1326 = vmatmul.mubr.f32.gmra.mrb[0].mxu0 %v1325
    %v1327 = vpop.f32.mrb[0].mxu0
    %v1328 = vpop.f32.mrb[0].mxu0
    %1329 = vmatprep.mubr.f32.mxu0 0.0
    %v1330 = vand.u32 %v168, 4294901760
    %v1331 = vsub.f32 %v168, %v1330
    %1332 = vmatmul.mubr.f32.gmra.mrb[0].mxu0 %v1331
    %v1333 = vpop.f32.mrb[0].mxu0
    %v1334 = vpop.f32.mrb[0].mxu0
    %1335 = vmatprep.mubr.f32.mxu0 0.0
    %v1336 = vand.u32 %v171, 4294901760
    %v1337 = vsub.f32 %v171, %v1336
    %1338 = vmatmul.mubr.f32.gmra.mrb[0].mxu0 %v1337
    %v1339 = vpop.f32.mrb[0].mxu0
    %v1340 = vpop.f32.mrb[0].mxu0
    %1341 = vdwg.mxu0
    %1342 = vmatprep.subr.mxu0 0.0
    %v1343 = vand.u32 %v78, 4294901760
    %1344 = vmatpush1.xpose.msra.mxu0 %v1343
    %1345 = vmatprep.subr.mxu0 0.0
    %v1346 = vand.u32 %v81, 4294901760
    %1347 = vmatpush1.xpose.msra.mxu0 %v1346
    %1348 = vmatprep.subr.mxu0 0.0
    %v1349 = vand.u32 %v84, 4294901760
    %1350 = vmatpush1.xpose.msra.mxu0 %v1349
    %1351 = vmatprep.subr.mxu0 0.0
    %v1352 = vand.u32 %v87, 4294901760
    %1353 = vmatpush1.xpose.msra.mxu0 %v1352
    %1354 = vmatprep.subr.mxu0 0.0
    %v1355 = vand.u32 %v90, 4294901760
    %1356 = vmatpush1.xpose.msra.mxu0 %v1355
    %1357 = vmatprep.subr.mxu0 0.0
    %v1358 = vand.u32 %v93, 4294901760
    %1359 = vmatpush1.xpose.msra.mxu0 %v1358
    %1360 = vmatprep.subr.mxu0 0.0
    %v1361 = vand.u32 %v96, 4294901760
    %1362 = vmatpush1.xpose.msra.mxu0 %v1361
    %1363 = vmatprep.subr.mxu0 0.0
    %v1364 = vand.u32 %v99, 4294901760
    %1365 = vmatpush1.xpose.msra.mxu0 %v1364
    %1366 = vmatprep.subr.mxu0 0.0
    %v1367 = vand.u32 %v102, 4294901760
    %1368 = vmatpush1.xpose.msra.mxu0 %v1367
    %1369 = vmatprep.subr.mxu0 0.0
    %v1370 = vand.u32 %v105, 4294901760
    %1371 = vmatpush1.xpose.msra.mxu0 %v1370
    %1372 = vmatprep.subr.mxu0 0.0
    %v1373 = vand.u32 %v108, 4294901760
    %1374 = vmatpush1.xpose.msra.mxu0 %v1373
    %1375 = vmatprep.subr.mxu0 0.0
    %v1376 = vand.u32 %v111, 4294901760
    %1377 = vmatpush1.xpose.msra.mxu0 %v1376
    %1378 = vmatprep.subr.mxu0 0.0
    %v1379 = vand.u32 %v114, 4294901760
    %1380 = vmatpush1.xpose.msra.mxu0 %v1379
    %1381 = vmatprep.subr.mxu0 0.0
    %v1382 = vand.u32 %v117, 4294901760
    %1383 = vmatpush1.xpose.msra.mxu0 %v1382
    %1384 = vmatprep.subr.mxu0 0.0
    %v1385 = vand.u32 %v120, 4294901760
    %1386 = vmatpush1.xpose.msra.mxu0 %v1385
    %1387 = vmatprep.subr.mxu0 0.0
    %v1388 = vand.u32 %v123, 4294901760
    %1389 = vmatpush1.xpose.msra.mxu0 %v1388
    %1390 = vmatprep.subr.mxu0 0.0
    %v1391 = vand.u32 %v126, 4294901760
    %1392 = vmatpush1.xpose.msra.mxu0 %v1391
    %1393 = vmatprep.subr.mxu0 0.0
    %v1394 = vand.u32 %v129, 4294901760
    %1395 = vmatpush1.xpose.msra.mxu0 %v1394
    %1396 = vmatprep.subr.mxu0 0.0
    %v1397 = vand.u32 %v132, 4294901760
    %1398 = vmatpush1.xpose.msra.mxu0 %v1397
    %1399 = vmatprep.subr.mxu0 0.0
    %v1400 = vand.u32 %v135, 4294901760
    %1401 = vmatpush1.xpose.msra.mxu0 %v1400
    %1402 = vmatprep.subr.mxu0 0.0
    %v1403 = vand.u32 %v138, 4294901760
    %1404 = vmatpush1.xpose.msra.mxu0 %v1403
    %1405 = vmatprep.subr.mxu0 0.0
    %v1406 = vand.u32 %v141, 4294901760
    %1407 = vmatpush1.xpose.msra.mxu0 %v1406
    %1408 = vmatprep.subr.mxu0 0.0
    %v1409 = vand.u32 %v144, 4294901760
    %1410 = vmatpush1.xpose.msra.mxu0 %v1409
    %1411 = vmatprep.subr.mxu0 0.0
    %v1412 = vand.u32 %v147, 4294901760
    %1413 = vmatpush1.xpose.msra.mxu0 %v1412
    %1414 = vmatprep.subr.mxu0 0.0
    %v1415 = vand.u32 %v150, 4294901760
    %1416 = vmatpush1.xpose.msra.mxu0 %v1415
    %1417 = vmatprep.subr.mxu0 0.0
    %v1418 = vand.u32 %v153, 4294901760
    %1419 = vmatpush1.xpose.msra.mxu0 %v1418
    %1420 = vmatprep.subr.mxu0 0.0
    %v1421 = vand.u32 %v156, 4294901760
    %1422 = vmatpush1.xpose.msra.mxu0 %v1421
    %1423 = vmatprep.subr.mxu0 0.0
    %v1424 = vand.u32 %v159, 4294901760
    %1425 = vmatpush1.xpose.msra.mxu0 %v1424
    %1426 = vmatprep.subr.mxu0 0.0
    %v1427 = vand.u32 %v162, 4294901760
    %1428 = vmatpush1.xpose.msra.mxu0 %v1427
    %1429 = vmatprep.subr.mxu0 0.0
    %v1430 = vand.u32 %v165, 4294901760
    %1431 = vmatpush1.xpose.msra.mxu0 %v1430
    %1432 = vmatprep.subr.mxu0 0.0
    %v1433 = vand.u32 %v168, 4294901760
    %1434 = vmatpush1.xpose.msra.mxu0 %v1433
    %1435 = vmatprep.subr.mxu0 0.0
    %v1436 = vand.u32 %v171, 4294901760
    %1437 = vmatpush1.xpose.msra.mxu0 %v1436
    %1438 = vmatprep.mubr.f32.mxu0 0.0
    %v1439 = vand.u32 %v78, 4294901760
    %v1440 = vsub.f32 %v78, %v1439
    %v1441 = vand.u32 %v1440, 4294901760
    %1442 = vmatmul.mubr.f32.gmra.mrb[0].mxu0 %v1441
    %v1443 = vpop.f32.mrb[0].mxu0
    %v1444 = vadd.f32 %v1128, %v1443
    %v1445 = vpop.f32.mrb[0].mxu0
    %1446 = vmatprep.mubr.f32.mxu0 0.0
    %v1447 = vand.u32 %v81, 4294901760
    %v1448 = vsub.f32 %v81, %v1447
    %v1449 = vand.u32 %v1448, 4294901760
    %1450 = vmatmul.mubr.f32.gmra.mrb[0].mxu0 %v1449
    %v1451 = vpop.f32.mrb[0].mxu0
    %v1452 = vadd.f32 %v1135, %v1451
    %v1453 = vpop.f32.mrb[0].mxu0
    %1454 = vmatprep.mubr.f32.mxu0 0.0
    %v1455 = vand.u32 %v84, 4294901760
    %v1456 = vsub.f32 %v84, %v1455
    %v1457 = vand.u32 %v1456, 4294901760
    %1458 = vmatmul.mubr.f32.gmra.mrb[0].mxu0 %v1457
    %v1459 = vpop.f32.mrb[0].mxu0
    %v1460 = vadd.f32 %v1142, %v1459
    %v1461 = vpop.f32.mrb[0].mxu0
    %1462 = vmatprep.mubr.f32.mxu0 0.0
    %v1463 = vand.u32 %v87, 4294901760
    %v1464 = vsub.f32 %v87, %v1463
    %v1465 = vand.u32 %v1464, 4294901760
    %1466 = vmatmul.mubr.f32.gmra.mrb[0].mxu0 %v1465
    %v1467 = vpop.f32.mrb[0].mxu0
    %v1468 = vadd.f32 %v1149, %v1467
    %v1469 = vpop.f32.mrb[0].mxu0
    %1470 = vmatprep.mubr.f32.mxu0 0.0
    %v1471 = vand.u32 %v90, 4294901760
    %v1472 = vsub.f32 %v90, %v1471
    %v1473 = vand.u32 %v1472, 4294901760
    %1474 = vmatmul.mubr.f32.gmra.mrb[0].mxu0 %v1473
    %v1475 = vpop.f32.mrb[0].mxu0
    %v1476 = vadd.f32 %v1156, %v1475
    %v1477 = vpop.f32.mrb[0].mxu0
    %1478 = vmatprep.mubr.f32.mxu0 0.0
    %v1479 = vand.u32 %v93, 4294901760
    %v1480 = vsub.f32 %v93, %v1479
    %v1481 = vand.u32 %v1480, 4294901760
    %1482 = vmatmul.mubr.f32.gmra.mrb[0].mxu0 %v1481
    %v1483 = vpop.f32.mrb[0].mxu0
    %v1484 = vadd.f32 %v1163, %v1483
    %v1485 = vpop.f32.mrb[0].mxu0
    %1486 = vmatprep.mubr.f32.mxu0 0.0
    %v1487 = vand.u32 %v96, 4294901760
    %v1488 = vsub.f32 %v96, %v1487
    %v1489 = vand.u32 %v1488, 4294901760
    %1490 = vmatmul.mubr.f32.gmra.mrb[0].mxu0 %v1489
    %v1491 = vpop.f32.mrb[0].mxu0
    %v1492 = vadd.f32 %v1170, %v1491
    %v1493 = vpop.f32.mrb[0].mxu0
    %1494 = vmatprep.mubr.f32.mxu0 0.0
    %v1495 = vand.u32 %v99, 4294901760
    %v1496 = vsub.f32 %v99, %v1495
    %v1497 = vand.u32 %v1496, 4294901760
    %1498 = vmatmul.mubr.f32.gmra.mrb[0].mxu0 %v1497
    %v1499 = vpop.f32.mrb[0].mxu0
    %v1500 = vadd.f32 %v1177, %v1499
    %v1501 = vpop.f32.mrb[0].mxu0
    %1502 = vmatprep.mubr.f32.mxu0 0.0
    %v1503 = vand.u32 %v102, 4294901760
    %v1504 = vsub.f32 %v102, %v1503
    %v1505 = vand.u32 %v1504, 4294901760
    %1506 = vmatmul.mubr.f32.gmra.mrb[0].mxu0 %v1505
    %v1507 = vpop.f32.mrb[0].mxu0
    %v1508 = vadd.f32 %v1184, %v1507
    %v1509 = vpop.f32.mrb[0].mxu0
    %1510 = vmatprep.mubr.f32.mxu0 0.0
    %v1511 = vand.u32 %v105, 4294901760
    %v1512 = vsub.f32 %v105, %v1511
    %v1513 = vand.u32 %v1512, 4294901760
    %1514 = vmatmul.mubr.f32.gmra.mrb[0].mxu0 %v1513
    %v1515 = vpop.f32.mrb[0].mxu0
    %v1516 = vadd.f32 %v1191, %v1515
    %v1517 = vpop.f32.mrb[0].mxu0
    %1518 = vmatprep.mubr.f32.mxu0 0.0
    %v1519 = vand.u32 %v108, 4294901760
    %v1520 = vsub.f32 %v108, %v1519
    %v1521 = vand.u32 %v1520, 4294901760
    %1522 = vmatmul.mubr.f32.gmra.mrb[0].mxu0 %v1521
    %v1523 = vpop.f32.mrb[0].mxu0
    %v1524 = vadd.f32 %v1198, %v1523
    %v1525 = vpop.f32.mrb[0].mxu0
    %1526 = vmatprep.mubr.f32.mxu0 0.0
    %v1527 = vand.u32 %v111, 4294901760
    %v1528 = vsub.f32 %v111, %v1527
    %v1529 = vand.u32 %v1528, 4294901760
    %1530 = vmatmul.mubr.f32.gmra.mrb[0].mxu0 %v1529
    %v1531 = vpop.f32.mrb[0].mxu0
    %v1532 = vadd.f32 %v1205, %v1531
    %v1533 = vpop.f32.mrb[0].mxu0
    %1534 = vmatprep.mubr.f32.mxu0 0.0
    %v1535 = vand.u32 %v114, 4294901760
    %v1536 = vsub.f32 %v114, %v1535
    %v1537 = vand.u32 %v1536, 4294901760
    %1538 = vmatmul.mubr.f32.gmra.mrb[0].mxu0 %v1537
    %v1539 = vpop.f32.mrb[0].mxu0
    %v1540 = vadd.f32 %v1212, %v1539
    %v1541 = vpop.f32.mrb[0].mxu0
    %1542 = vmatprep.mubr.f32.mxu0 0.0
    %v1543 = vand.u32 %v117, 4294901760
    %v1544 = vsub.f32 %v117, %v1543
    %v1545 = vand.u32 %v1544, 4294901760
    %1546 = vmatmul.mubr.f32.gmra.mrb[0].mxu0 %v1545
    %v1547 = vpop.f32.mrb[0].mxu0
    %v1548 = vpop.f32.mrb[0].mxu0
    %1549 = vmatprep.mubr.f32.mxu0 0.0
    %v1550 = vand.u32 %v120, 4294901760
    %v1551 = vsub.f32 %v120, %v1550
    %v1552 = vand.u32 %v1551, 4294901760
    %1553 = vmatmul.mubr.f32.gmra.mrb[0].mxu0 %v1552
    %v1554 = vpop.f32.mrb[0].mxu0
    %v1555 = vpop.f32.mrb[0].mxu0
    %1556 = vmatprep.mubr.f32.mxu0 0.0
    %v1557 = vand.u32 %v123, 4294901760
    %v1558 = vsub.f32 %v123, %v1557
    %v1559 = vand.u32 %v1558, 4294901760
    %1560 = vmatmul.mubr.f32.gmra.mrb[0].mxu0 %v1559
    %v1561 = vpop.f32.mrb[0].mxu0
    %v1562 = vpop.f32.mrb[0].mxu0
    %1563 = vmatprep.mubr.f32.mxu0 0.0
    %v1564 = vand.u32 %v126, 4294901760
    %v1565 = vsub.f32 %v126, %v1564
    %v1566 = vand.u32 %v1565, 4294901760
    %1567 = vmatmul.mubr.f32.gmra.mrb[0].mxu0 %v1566
    %v1568 = vpop.f32.mrb[0].mxu0
    %v1569 = vpop.f32.mrb[0].mxu0
    %v1570 = vadd.f32 %v1238, %v1569
    %1571 = vmatprep.mubr.f32.mxu0 0.0
    %v1572 = vand.u32 %v129, 4294901760
    %v1573 = vsub.f32 %v129, %v1572
    %v1574 = vand.u32 %v1573, 4294901760
    %1575 = vmatmul.mubr.f32.gmra.mrb[0].mxu0 %v1574
    %v1576 = vpop.f32.mrb[0].mxu0
    %v1577 = vpop.f32.mrb[0].mxu0
    %v1578 = vadd.f32 %v1245, %v1577
    %1579 = vmatprep.mubr.f32.mxu0 0.0
    %v1580 = vand.u32 %v132, 4294901760
    %v1581 = vsub.f32 %v132, %v1580
    %v1582 = vand.u32 %v1581, 4294901760
    %1583 = vmatmul.mubr.f32.gmra.mrb[0].mxu0 %v1582
    %v1584 = vpop.f32.mrb[0].mxu0
    %v1585 = vpop.f32.mrb[0].mxu0
    %v1586 = vadd.f32 %v1252, %v1585
    %1587 = vmatprep.mubr.f32.mxu0 0.0
    %v1588 = vand.u32 %v135, 4294901760
    %v1589 = vsub.f32 %v135, %v1588
    %v1590 = vand.u32 %v1589, 4294901760
    %1591 = vmatmul.mubr.f32.gmra.mrb[0].mxu0 %v1590
    %v1592 = vpop.f32.mrb[0].mxu0
    %v1593 = vpop.f32.mrb[0].mxu0
    %v1594 = vadd.f32 %v1259, %v1593
    %1595 = vmatprep.mubr.f32.mxu0 0.0
    %v1596 = vand.u32 %v138, 4294901760
    %v1597 = vsub.f32 %v138, %v1596
    %v1598 = vand.u32 %v1597, 4294901760
    %1599 = vmatmul.mubr.f32.gmra.mrb[0].mxu0 %v1598
    %v1600 = vpop.f32.mrb[0].mxu0
    %v1601 = vpop.f32.mrb[0].mxu0
    %v1602 = vadd.f32 %v1266, %v1601
    %1603 = vmatprep.mubr.f32.mxu0 0.0
    %v1604 = vand.u32 %v141, 4294901760
    %v1605 = vsub.f32 %v141, %v1604
    %v1606 = vand.u32 %v1605, 4294901760
    %1607 = vmatmul.mubr.f32.gmra.mrb[0].mxu0 %v1606
    %v1608 = vpop.f32.mrb[0].mxu0
    %v1609 = vpop.f32.mrb[0].mxu0
    %v1610 = vadd.f32 %v1273, %v1609
    %1611 = vmatprep.mubr.f32.mxu0 0.0
    %v1612 = vand.u32 %v144, 4294901760
    %v1613 = vsub.f32 %v144, %v1612
    %v1614 = vand.u32 %v1613, 4294901760
    %1615 = vmatmul.mubr.f32.gmra.mrb[0].mxu0 %v1614
    %v1616 = vpop.f32.mrb[0].mxu0
    %v1617 = vpop.f32.mrb[0].mxu0
    %v1618 = vadd.f32 %v1280, %v1617
    %1619 = vmatprep.mubr.f32.mxu0 0.0
    %v1620 = vand.u32 %v147, 4294901760
    %v1621 = vsub.f32 %v147, %v1620
    %v1622 = vand.u32 %v1621, 4294901760
    %1623 = vmatmul.mubr.f32.gmra.mrb[0].mxu0 %v1622
    %v1624 = vpop.f32.mrb[0].mxu0
    %v1625 = vpop.f32.mrb[0].mxu0
    %v1626 = vadd.f32 %v1287, %v1625
    %1627 = vmatprep.mubr.f32.mxu0 0.0
    %v1628 = vand.u32 %v150, 4294901760
    %v1629 = vsub.f32 %v150, %v1628
    %v1630 = vand.u32 %v1629, 4294901760
    %1631 = vmatmul.mubr.f32.gmra.mrb[0].mxu0 %v1630
    %v1632 = vpop.f32.mrb[0].mxu0
    %v1633 = vpop.f32.mrb[0].mxu0
    %v1634 = vadd.f32 %v1294, %v1633
    %1635 = vmatprep.mubr.f32.mxu0 0.0
    %v1636 = vand.u32 %v153, 4294901760
    %v1637 = vsub.f32 %v153, %v1636
    %v1638 = vand.u32 %v1637, 4294901760
    %1639 = vmatmul.mubr.f32.gmra.mrb[0].mxu0 %v1638
    %v1640 = vpop.f32.mrb[0].mxu0
    %v1641 = vpop.f32.mrb[0].mxu0
    %v1642 = vadd.f32 %v1301, %v1641
    %1643 = vmatprep.mubr.f32.mxu0 0.0
    %v1644 = vand.u32 %v156, 4294901760
    %v1645 = vsub.f32 %v156, %v1644
    %v1646 = vand.u32 %v1645, 4294901760
    %1647 = vmatmul.mubr.f32.gmra.mrb[0].mxu0 %v1646
    %v1648 = vpop.f32.mrb[0].mxu0
    %v1649 = vpop.f32.mrb[0].mxu0
    %v1650 = vadd.f32 %v1308, %v1649
    %1651 = vmatprep.mubr.f32.mxu0 0.0
    %v1652 = vand.u32 %v159, 4294901760
    %v1653 = vsub.f32 %v159, %v1652
    %v1654 = vand.u32 %v1653, 4294901760
    %1655 = vmatmul.mubr.f32.gmra.mrb[0].mxu0 %v1654
    %v1656 = vpop.f32.mrb[0].mxu0
    %v1657 = vpop.f32.mrb[0].mxu0
    %v1658 = vadd.f32 %v1315, %v1657
    %1659 = vmatprep.mubr.f32.mxu0 0.0
    %v1660 = vand.u32 %v162, 4294901760
    %v1661 = vsub.f32 %v162, %v1660
    %v1662 = vand.u32 %v1661, 4294901760
    %1663 = vmatmul.mubr.f32.gmra.mrb[0].mxu0 %v1662
    %v1664 = vpop.f32.mrb[0].mxu0
    %v1665 = vpop.f32.mrb[0].mxu0
    %v1666 = vadd.f32 %v1322, %v1665
    %1667 = vmatprep.mubr.f32.mxu0 0.0
    %v1668 = vand.u32 %v165, 4294901760
    %v1669 = vsub.f32 %v165, %v1668
    %v1670 = vand.u32 %v1669, 4294901760
    %1671 = vmatmul.mubr.f32.gmra.mrb[0].mxu0 %v1670
    %v1672 = vpop.f32.mrb[0].mxu0
    %v1673 = vpop.f32.mrb[0].mxu0
    %1674 = vmatprep.mubr.f32.mxu0 0.0
    %v1675 = vand.u32 %v168, 4294901760
    %v1676 = vsub.f32 %v168, %v1675
    %v1677 = vand.u32 %v1676, 4294901760
    %1678 = vmatmul.mubr.f32.gmra.mrb[0].mxu0 %v1677
    %v1679 = vpop.f32.mrb[0].mxu0
    %v1680 = vpop.f32.mrb[0].mxu0
    %1681 = vmatprep.mubr.f32.mxu0 0.0
    %v1682 = vand.u32 %v171, 4294901760
    %v1683 = vsub.f32 %v171, %v1682
    %v1684 = vand.u32 %v1683, 4294901760
    %1685 = vmatmul.mubr.f32.gmra.mrb[0].mxu0 %v1684
    %v1686 = vpop.f32.mrb[0].mxu0
    %v1687 = vpop.f32.mrb[0].mxu0
    %1688 = vdwg.mxu0
    %1689 = vmatprep.subr.mxu0 0.0
    %v1690 = vand.u32 %v78, 4294901760
    %v1691 = vsub.f32 %v78, %v1690
    %v1692 = vand.u32 %v1691, 4294901760
    %1693 = vmatpush1.xpose.msra.mxu0 %v1692
    %1694 = vmatprep.subr.mxu0 0.0
    %v1695 = vand.u32 %v81, 4294901760
    %v1696 = vsub.f32 %v81, %v1695
    %v1697 = vand.u32 %v1696, 4294901760
    %1698 = vmatpush1.xpose.msra.mxu0 %v1697
    %1699 = vmatprep.subr.mxu0 0.0
    %v1700 = vand.u32 %v84, 4294901760
    %v1701 = vsub.f32 %v84, %v1700
    %v1702 = vand.u32 %v1701, 4294901760
    %1703 = vmatpush1.xpose.msra.mxu0 %v1702
    %1704 = vmatprep.subr.mxu0 0.0
    %v1705 = vand.u32 %v87, 4294901760
    %v1706 = vsub.f32 %v87, %v1705
    %v1707 = vand.u32 %v1706, 4294901760
    %1708 = vmatpush1.xpose.msra.mxu0 %v1707
    %1709 = vmatprep.subr.mxu0 0.0
    %v1710 = vand.u32 %v90, 4294901760
    %v1711 = vsub.f32 %v90, %v1710
    %v1712 = vand.u32 %v1711, 4294901760
    %1713 = vmatpush1.xpose.msra.mxu0 %v1712
    %1714 = vmatprep.subr.mxu0 0.0
    %v1715 = vand.u32 %v93, 4294901760
    %v1716 = vsub.f32 %v93, %v1715
    %v1717 = vand.u32 %v1716, 4294901760
    %1718 = vmatpush1.xpose.msra.mxu0 %v1717
    %1719 = vmatprep.subr.mxu0 0.0
    %v1720 = vand.u32 %v96, 4294901760
    %v1721 = vsub.f32 %v96, %v1720
    %v1722 = vand.u32 %v1721, 4294901760
    %1723 = vmatpush1.xpose.msra.mxu0 %v1722
    %1724 = vmatprep.subr.mxu0 0.0
    %v1725 = vand.u32 %v99, 4294901760
    %v1726 = vsub.f32 %v99, %v1725
    %v1727 = vand.u32 %v1726, 4294901760
    %1728 = vmatpush1.xpose.msra.mxu0 %v1727
    %1729 = vmatprep.subr.mxu0 0.0
    %v1730 = vand.u32 %v102, 4294901760
    %v1731 = vsub.f32 %v102, %v1730
    %v1732 = vand.u32 %v1731, 4294901760
    %1733 = vmatpush1.xpose.msra.mxu0 %v1732
    %1734 = vmatprep.subr.mxu0 0.0
    %v1735 = vand.u32 %v105, 4294901760
    %v1736 = vsub.f32 %v105, %v1735
    %v1737 = vand.u32 %v1736, 4294901760
    %1738 = vmatpush1.xpose.msra.mxu0 %v1737
    %1739 = vmatprep.subr.mxu0 0.0
    %v1740 = vand.u32 %v108, 4294901760
    %v1741 = vsub.f32 %v108, %v1740
    %v1742 = vand.u32 %v1741, 4294901760
    %1743 = vmatpush1.xpose.msra.mxu0 %v1742
    %1744 = vmatprep.subr.mxu0 0.0
    %v1745 = vand.u32 %v111, 4294901760
    %v1746 = vsub.f32 %v111, %v1745
    %v1747 = vand.u32 %v1746, 4294901760
    %1748 = vmatpush1.xpose.msra.mxu0 %v1747
    %1749 = vmatprep.subr.mxu0 0.0
    %v1750 = vand.u32 %v114, 4294901760
    %v1751 = vsub.f32 %v114, %v1750
    %v1752 = vand.u32 %v1751, 4294901760
    %1753 = vmatpush1.xpose.msra.mxu0 %v1752
    %1754 = vmatprep.subr.mxu0 0.0
    %v1755 = vand.u32 %v117, 4294901760
    %v1756 = vsub.f32 %v117, %v1755
    %v1757 = vand.u32 %v1756, 4294901760
    %1758 = vmatpush1.xpose.msra.mxu0 %v1757
    %1759 = vmatprep.subr.mxu0 0.0
    %v1760 = vand.u32 %v120, 4294901760
    %v1761 = vsub.f32 %v120, %v1760
    %v1762 = vand.u32 %v1761, 4294901760
    %1763 = vmatpush1.xpose.msra.mxu0 %v1762
    %1764 = vmatprep.subr.mxu0 0.0
    %v1765 = vand.u32 %v123, 4294901760
    %v1766 = vsub.f32 %v123, %v1765
    %v1767 = vand.u32 %v1766, 4294901760
    %1768 = vmatpush1.xpose.msra.mxu0 %v1767
    %1769 = vmatprep.subr.mxu0 0.0
    %v1770 = vand.u32 %v126, 4294901760
    %v1771 = vsub.f32 %v126, %v1770
    %v1772 = vand.u32 %v1771, 4294901760
    %1773 = vmatpush1.xpose.msra.mxu0 %v1772
    %1774 = vmatprep.subr.mxu0 0.0
    %v1775 = vand.u32 %v129, 4294901760
    %v1776 = vsub.f32 %v129, %v1775
    %v1777 = vand.u32 %v1776, 4294901760
    %1778 = vmatpush1.xpose.msra.mxu0 %v1777
    %1779 = vmatprep.subr.mxu0 0.0
    %v1780 = vand.u32 %v132, 4294901760
    %v1781 = vsub.f32 %v132, %v1780
    %v1782 = vand.u32 %v1781, 4294901760
    %1783 = vmatpush1.xpose.msra.mxu0 %v1782
    %1784 = vmatprep.subr.mxu0 0.0
    %v1785 = vand.u32 %v135, 4294901760
    %v1786 = vsub.f32 %v135, %v1785
    %v1787 = vand.u32 %v1786, 4294901760
    %1788 = vmatpush1.xpose.msra.mxu0 %v1787
    %1789 = vmatprep.subr.mxu0 0.0
    %v1790 = vand.u32 %v138, 4294901760
    %v1791 = vsub.f32 %v138, %v1790
    %v1792 = vand.u32 %v1791, 4294901760
    %1793 = vmatpush1.xpose.msra.mxu0 %v1792
    %1794 = vmatprep.subr.mxu0 0.0
    %v1795 = vand.u32 %v141, 4294901760
    %v1796 = vsub.f32 %v141, %v1795
    %v1797 = vand.u32 %v1796, 4294901760
    %1798 = vmatpush1.xpose.msra.mxu0 %v1797
    %1799 = vmatprep.subr.mxu0 0.0
    %v1800 = vand.u32 %v144, 4294901760
    %v1801 = vsub.f32 %v144, %v1800
    %v1802 = vand.u32 %v1801, 4294901760
    %1803 = vmatpush1.xpose.msra.mxu0 %v1802
    %1804 = vmatprep.subr.mxu0 0.0
    %v1805 = vand.u32 %v147, 4294901760
    %v1806 = vsub.f32 %v147, %v1805
    %v1807 = vand.u32 %v1806, 4294901760
    %1808 = vmatpush1.xpose.msra.mxu0 %v1807
    %1809 = vmatprep.subr.mxu0 0.0
    %v1810 = vand.u32 %v150, 4294901760
    %v1811 = vsub.f32 %v150, %v1810
    %v1812 = vand.u32 %v1811, 4294901760
    %1813 = vmatpush1.xpose.msra.mxu0 %v1812
    %1814 = vmatprep.subr.mxu0 0.0
    %v1815 = vand.u32 %v153, 4294901760
    %v1816 = vsub.f32 %v153, %v1815
    %v1817 = vand.u32 %v1816, 4294901760
    %1818 = vmatpush1.xpose.msra.mxu0 %v1817
    %1819 = vmatprep.subr.mxu0 0.0
    %v1820 = vand.u32 %v156, 4294901760
    %v1821 = vsub.f32 %v156, %v1820
    %v1822 = vand.u32 %v1821, 4294901760
    %1823 = vmatpush1.xpose.msra.mxu0 %v1822
    %1824 = vmatprep.subr.mxu0 0.0
    %v1825 = vand.u32 %v159, 4294901760
    %v1826 = vsub.f32 %v159, %v1825
    %v1827 = vand.u32 %v1826, 4294901760
    %1828 = vmatpush1.xpose.msra.mxu0 %v1827
    %1829 = vmatprep.subr.mxu0 0.0
    %v1830 = vand.u32 %v162, 4294901760
    %v1831 = vsub.f32 %v162, %v1830
    %v1832 = vand.u32 %v1831, 4294901760
    %1833 = vmatpush1.xpose.msra.mxu0 %v1832
    %1834 = vmatprep.subr.mxu0 0.0
    %v1835 = vand.u32 %v165, 4294901760
    %v1836 = vsub.f32 %v165, %v1835
    %v1837 = vand.u32 %v1836, 4294901760
    %1838 = vmatpush1.xpose.msra.mxu0 %v1837
    %1839 = vmatprep.subr.mxu0 0.0
    %v1840 = vand.u32 %v168, 4294901760
    %v1841 = vsub.f32 %v168, %v1840
    %v1842 = vand.u32 %v1841, 4294901760
    %1843 = vmatpush1.xpose.msra.mxu0 %v1842
    %1844 = vmatprep.subr.mxu0 0.0
    %v1845 = vand.u32 %v171, 4294901760
    %v1846 = vsub.f32 %v171, %v1845
    %v1847 = vand.u32 %v1846, 4294901760
    %1848 = vmatpush1.xpose.msra.mxu0 %v1847
    %1849 = vmatprep.mubr.f32.mxu0 0.0
    %v1850 = vand.u32 %v78, 4294901760
    %1851 = vmatmul.mubr.f32.gmra.mrb[0].mxu0 %v1850
    %v1852 = vpop.f32.mrb[0].mxu0
    %v1853 = vadd.f32 %v1444, %v1852
    %v1854 = vpop.f32.mrb[0].mxu0
    %1855 = vmatprep.mubr.f32.mxu0 0.0
    %v1856 = vand.u32 %v81, 4294901760
    %1857 = vmatmul.mubr.f32.gmra.mrb[0].mxu0 %v1856
    %v1858 = vpop.f32.mrb[0].mxu0
    %v1859 = vadd.f32 %v1452, %v1858
    %v1860 = vpop.f32.mrb[0].mxu0
    %1861 = vmatprep.mubr.f32.mxu0 0.0
    %v1862 = vand.u32 %v84, 4294901760
    %1863 = vmatmul.mubr.f32.gmra.mrb[0].mxu0 %v1862
    %v1864 = vpop.f32.mrb[0].mxu0
    %v1865 = vadd.f32 %v1460, %v1864
    %v1866 = vpop.f32.mrb[0].mxu0
    %1867 = vmatprep.mubr.f32.mxu0 0.0
    %v1868 = vand.u32 %v87, 4294901760
    %1869 = vmatmul.mubr.f32.gmra.mrb[0].mxu0 %v1868
    %v1870 = vpop.f32.mrb[0].mxu0
    %v1871 = vadd.f32 %v1468, %v1870
    %v1872 = vpop.f32.mrb[0].mxu0
    %1873 = vmatprep.mubr.f32.mxu0 0.0
    %v1874 = vand.u32 %v90, 4294901760
    %1875 = vmatmul.mubr.f32.gmra.mrb[0].mxu0 %v1874
    %v1876 = vpop.f32.mrb[0].mxu0
    %v1877 = vadd.f32 %v1476, %v1876
    %v1878 = vpop.f32.mrb[0].mxu0
    %1879 = vmatprep.mubr.f32.mxu0 0.0
    %v1880 = vand.u32 %v93, 4294901760
    %1881 = vmatmul.mubr.f32.gmra.mrb[0].mxu0 %v1880
    %v1882 = vpop.f32.mrb[0].mxu0
    %v1883 = vadd.f32 %v1484, %v1882
    %v1884 = vpop.f32.mrb[0].mxu0
    %1885 = vmatprep.mubr.f32.mxu0 0.0
    %v1886 = vand.u32 %v96, 4294901760
    %1887 = vmatmul.mubr.f32.gmra.mrb[0].mxu0 %v1886
    %v1888 = vpop.f32.mrb[0].mxu0
    %v1889 = vadd.f32 %v1492, %v1888
    %v1890 = vpop.f32.mrb[0].mxu0
    %1891 = vmatprep.mubr.f32.mxu0 0.0
    %v1892 = vand.u32 %v99, 4294901760
    %1893 = vmatmul.mubr.f32.gmra.mrb[0].mxu0 %v1892
    %v1894 = vpop.f32.mrb[0].mxu0
    %v1895 = vadd.f32 %v1500, %v1894
    %v1896 = vpop.f32.mrb[0].mxu0
    %1897 = vmatprep.mubr.f32.mxu0 0.0
    %v1898 = vand.u32 %v102, 4294901760
    %1899 = vmatmul.mubr.f32.gmra.mrb[0].mxu0 %v1898
    %v1900 = vpop.f32.mrb[0].mxu0
    %v1901 = vadd.f32 %v1508, %v1900
    %v1902 = vpop.f32.mrb[0].mxu0
    %1903 = vmatprep.mubr.f32.mxu0 0.0
    %v1904 = vand.u32 %v105, 4294901760
    %1905 = vmatmul.mubr.f32.gmra.mrb[0].mxu0 %v1904
    %v1906 = vpop.f32.mrb[0].mxu0
    %v1907 = vadd.f32 %v1516, %v1906
    %v1908 = vpop.f32.mrb[0].mxu0
    %1909 = vmatprep.mubr.f32.mxu0 0.0
    %v1910 = vand.u32 %v108, 4294901760
    %1911 = vmatmul.mubr.f32.gmra.mrb[0].mxu0 %v1910
    %v1912 = vpop.f32.mrb[0].mxu0
    %v1913 = vadd.f32 %v1524, %v1912
    %v1914 = vpop.f32.mrb[0].mxu0
    %1915 = vmatprep.mubr.f32.mxu0 0.0
    %v1916 = vand.u32 %v111, 4294901760
    %1917 = vmatmul.mubr.f32.gmra.mrb[0].mxu0 %v1916
    %v1918 = vpop.f32.mrb[0].mxu0
    %v1919 = vadd.f32 %v1532, %v1918
    %v1920 = vpop.f32.mrb[0].mxu0
    %1921 = vmatprep.mubr.f32.mxu0 0.0
    %v1922 = vand.u32 %v114, 4294901760
    %1923 = vmatmul.mubr.f32.gmra.mrb[0].mxu0 %v1922
    %v1924 = vpop.f32.mrb[0].mxu0
    %v1925 = vadd.f32 %v1540, %v1924
    %v1926 = vpop.f32.mrb[0].mxu0
    %1927 = vmatprep.mubr.f32.mxu0 0.0
    %v1928 = vand.u32 %v117, 4294901760
    %1929 = vmatmul.mubr.f32.gmra.mrb[0].mxu0 %v1928
    %v1930 = vpop.f32.mrb[0].mxu0
    %v1931 = vpop.f32.mrb[0].mxu0
    %1932 = vmatprep.mubr.f32.mxu0 0.0
    %v1933 = vand.u32 %v120, 4294901760
    %1934 = vmatmul.mubr.f32.gmra.mrb[0].mxu0 %v1933
    %v1935 = vpop.f32.mrb[0].mxu0
    %v1936 = vpop.f32.mrb[0].mxu0
    %1937 = vmatprep.mubr.f32.mxu0 0.0
    %v1938 = vand.u32 %v123, 4294901760
    %1939 = vmatmul.mubr.f32.gmra.mrb[0].mxu0 %v1938
    %v1940 = vpop.f32.mrb[0].mxu0
    %v1941 = vpop.f32.mrb[0].mxu0
    %1942 = vmatprep.mubr.f32.mxu0 0.0
    %v1943 = vand.u32 %v126, 4294901760
    %1944 = vmatmul.mubr.f32.gmra.mrb[0].mxu0 %v1943
    %v1945 = vpop.f32.mrb[0].mxu0
    %v1946 = vpop.f32.mrb[0].mxu0
    %v1947 = vadd.f32 %v1570, %v1946
    %1948 = vmatprep.mubr.f32.mxu0 0.0
    %v1949 = vand.u32 %v129, 4294901760
    %1950 = vmatmul.mubr.f32.gmra.mrb[0].mxu0 %v1949
    %v1951 = vpop.f32.mrb[0].mxu0
    %v1952 = vpop.f32.mrb[0].mxu0
    %v1953 = vadd.f32 %v1578, %v1952
    %1954 = vmatprep.mubr.f32.mxu0 0.0
    %v1955 = vand.u32 %v132, 4294901760
    %1956 = vmatmul.mubr.f32.gmra.mrb[0].mxu0 %v1955
    %v1957 = vpop.f32.mrb[0].mxu0
    %v1958 = vpop.f32.mrb[0].mxu0
    %v1959 = vadd.f32 %v1586, %v1958
    %1960 = vmatprep.mubr.f32.mxu0 0.0
    %v1961 = vand.u32 %v135, 4294901760
    %1962 = vmatmul.mubr.f32.gmra.mrb[0].mxu0 %v1961
    %v1963 = vpop.f32.mrb[0].mxu0
    %v1964 = vpop.f32.mrb[0].mxu0
    %v1965 = vadd.f32 %v1594, %v1964
    %1966 = vmatprep.mubr.f32.mxu0 0.0
    %v1967 = vand.u32 %v138, 4294901760
    %1968 = vmatmul.mubr.f32.gmra.mrb[0].mxu0 %v1967
    %v1969 = vpop.f32.mrb[0].mxu0
    %v1970 = vpop.f32.mrb[0].mxu0
    %v1971 = vadd.f32 %v1602, %v1970
    %1972 = vmatprep.mubr.f32.mxu0 0.0
    %v1973 = vand.u32 %v141, 4294901760
    %1974 = vmatmul.mubr.f32.gmra.mrb[0].mxu0 %v1973
    %v1975 = vpop.f32.mrb[0].mxu0
    %v1976 = vpop.f32.mrb[0].mxu0
    %v1977 = vadd.f32 %v1610, %v1976
    %1978 = vmatprep.mubr.f32.mxu0 0.0
    %v1979 = vand.u32 %v144, 4294901760
    %1980 = vmatmul.mubr.f32.gmra.mrb[0].mxu0 %v1979
    %v1981 = vpop.f32.mrb[0].mxu0
    %v1982 = vpop.f32.mrb[0].mxu0
    %v1983 = vadd.f32 %v1618, %v1982
    %1984 = vmatprep.mubr.f32.mxu0 0.0
    %v1985 = vand.u32 %v147, 4294901760
    %1986 = vmatmul.mubr.f32.gmra.mrb[0].mxu0 %v1985
    %v1987 = vpop.f32.mrb[0].mxu0
    %v1988 = vpop.f32.mrb[0].mxu0
    %v1989 = vadd.f32 %v1626, %v1988
    %1990 = vmatprep.mubr.f32.mxu0 0.0
    %v1991 = vand.u32 %v150, 4294901760
    %1992 = vmatmul.mubr.f32.gmra.mrb[0].mxu0 %v1991
    %v1993 = vpop.f32.mrb[0].mxu0
    %v1994 = vpop.f32.mrb[0].mxu0
    %v1995 = vadd.f32 %v1634, %v1994
    %1996 = vmatprep.mubr.f32.mxu0 0.0
    %v1997 = vand.u32 %v153, 4294901760
    %1998 = vmatmul.mubr.f32.gmra.mrb[0].mxu0 %v1997
    %v1999 = vpop.f32.mrb[0].mxu0
    %v2000 = vpop.f32.mrb[0].mxu0
    %v2001 = vadd.f32 %v1642, %v2000
    %2002 = vmatprep.mubr.f32.mxu0 0.0
    %v2003 = vand.u32 %v156, 4294901760
    %2004 = vmatmul.mubr.f32.gmra.mrb[0].mxu0 %v2003
    %v2005 = vpop.f32.mrb[0].mxu0
    %v2006 = vpop.f32.mrb[0].mxu0
    %v2007 = vadd.f32 %v1650, %v2006
    %2008 = vmatprep.mubr.f32.mxu0 0.0
    %v2009 = vand.u32 %v159, 4294901760
    %2010 = vmatmul.mubr.f32.gmra.mrb[0].mxu0 %v2009
    %v2011 = vpop.f32.mrb[0].mxu0
    %v2012 = vpop.f32.mrb[0].mxu0
    %v2013 = vadd.f32 %v1658, %v2012
    %2014 = vmatprep.mubr.f32.mxu0 0.0
    %v2015 = vand.u32 %v162, 4294901760
    %2016 = vmatmul.mubr.f32.gmra.mrb[0].mxu0 %v2015
    %v2017 = vpop.f32.mrb[0].mxu0
    %v2018 = vpop.f32.mrb[0].mxu0
    %v2019 = vadd.f32 %v1666, %v2018
    %2020 = vmatprep.mubr.f32.mxu0 0.0
    %v2021 = vand.u32 %v165, 4294901760
    %2022 = vmatmul.mubr.f32.gmra.mrb[0].mxu0 %v2021
    %v2023 = vpop.f32.mrb[0].mxu0
    %v2024 = vpop.f32.mrb[0].mxu0
    %2025 = vmatprep.mubr.f32.mxu0 0.0
    %v2026 = vand.u32 %v168, 4294901760
    %2027 = vmatmul.mubr.f32.gmra.mrb[0].mxu0 %v2026
    %v2028 = vpop.f32.mrb[0].mxu0
    %v2029 = vpop.f32.mrb[0].mxu0
    %2030 = vmatprep.mubr.f32.mxu0 0.0
    %v2031 = vand.u32 %v171, 4294901760
    %2032 = vmatmul.mubr.f32.gmra.mrb[0].mxu0 %v2031
    %v2033 = vpop.f32.mrb[0].mxu0
    %v2034 = vpop.f32.mrb[0].mxu0
    %2035 = vdwg.mxu0
    %2036 = vmatprep.subr.mxu0 0.0
    %v2037 = vand.u32 %v78, 4294901760
    %2038 = vmatpush1.xpose.msra.mxu0 %v2037
    %2039 = vmatprep.subr.mxu0 0.0
    %v2040 = vand.u32 %v81, 4294901760
    %2041 = vmatpush1.xpose.msra.mxu0 %v2040
    %2042 = vmatprep.subr.mxu0 0.0
    %v2043 = vand.u32 %v84, 4294901760
    %2044 = vmatpush1.xpose.msra.mxu0 %v2043
    %2045 = vmatprep.subr.mxu0 0.0
    %v2046 = vand.u32 %v87, 4294901760
    %2047 = vmatpush1.xpose.msra.mxu0 %v2046
    %2048 = vmatprep.subr.mxu0 0.0
    %v2049 = vand.u32 %v90, 4294901760
    %2050 = vmatpush1.xpose.msra.mxu0 %v2049
    %2051 = vmatprep.subr.mxu0 0.0
    %v2052 = vand.u32 %v93, 4294901760
    %2053 = vmatpush1.xpose.msra.mxu0 %v2052
    %2054 = vmatprep.subr.mxu0 0.0
    %v2055 = vand.u32 %v96, 4294901760
    %2056 = vmatpush1.xpose.msra.mxu0 %v2055
    %2057 = vmatprep.subr.mxu0 0.0
    %v2058 = vand.u32 %v99, 4294901760
    %2059 = vmatpush1.xpose.msra.mxu0 %v2058
    %2060 = vmatprep.subr.mxu0 0.0
    %v2061 = vand.u32 %v102, 4294901760
    %2062 = vmatpush1.xpose.msra.mxu0 %v2061
    %2063 = vmatprep.subr.mxu0 0.0
    %v2064 = vand.u32 %v105, 4294901760
    %2065 = vmatpush1.xpose.msra.mxu0 %v2064
    %2066 = vmatprep.subr.mxu0 0.0
    %v2067 = vand.u32 %v108, 4294901760
    %2068 = vmatpush1.xpose.msra.mxu0 %v2067
    %2069 = vmatprep.subr.mxu0 0.0
    %v2070 = vand.u32 %v111, 4294901760
    %2071 = vmatpush1.xpose.msra.mxu0 %v2070
    %2072 = vmatprep.subr.mxu0 0.0
    %v2073 = vand.u32 %v114, 4294901760
    %2074 = vmatpush1.xpose.msra.mxu0 %v2073
    %2075 = vmatprep.subr.mxu0 0.0
    %v2076 = vand.u32 %v117, 4294901760
    %2077 = vmatpush1.xpose.msra.mxu0 %v2076
    %2078 = vmatprep.subr.mxu0 0.0
    %v2079 = vand.u32 %v120, 4294901760
    %2080 = vmatpush1.xpose.msra.mxu0 %v2079
    %2081 = vmatprep.subr.mxu0 0.0
    %v2082 = vand.u32 %v123, 4294901760
    %2083 = vmatpush1.xpose.msra.mxu0 %v2082
    %2084 = vmatprep.subr.mxu0 0.0
    %v2085 = vand.u32 %v126, 4294901760
    %2086 = vmatpush1.xpose.msra.mxu0 %v2085
    %2087 = vmatprep.subr.mxu0 0.0
    %v2088 = vand.u32 %v129, 4294901760
    %2089 = vmatpush1.xpose.msra.mxu0 %v2088
    %2090 = vmatprep.subr.mxu0 0.0
    %v2091 = vand.u32 %v132, 4294901760
    %2092 = vmatpush1.xpose.msra.mxu0 %v2091
    %2093 = vmatprep.subr.mxu0 0.0
    %v2094 = vand.u32 %v135, 4294901760
    %2095 = vmatpush1.xpose.msra.mxu0 %v2094
    %2096 = vmatprep.subr.mxu0 0.0
    %v2097 = vand.u32 %v138, 4294901760
    %2098 = vmatpush1.xpose.msra.mxu0 %v2097
    %2099 = vmatprep.subr.mxu0 0.0
    %v2100 = vand.u32 %v141, 4294901760
    %2101 = vmatpush1.xpose.msra.mxu0 %v2100
    %2102 = vmatprep.subr.mxu0 0.0
    %v2103 = vand.u32 %v144, 4294901760
    %2104 = vmatpush1.xpose.msra.mxu0 %v2103
    %2105 = vmatprep.subr.mxu0 0.0
    %v2106 = vand.u32 %v147, 4294901760
    %2107 = vmatpush1.xpose.msra.mxu0 %v2106
    %2108 = vmatprep.subr.mxu0 0.0
    %v2109 = vand.u32 %v150, 4294901760
    %2110 = vmatpush1.xpose.msra.mxu0 %v2109
    %2111 = vmatprep.subr.mxu0 0.0
    %v2112 = vand.u32 %v153, 4294901760
    %2113 = vmatpush1.xpose.msra.mxu0 %v2112
    %2114 = vmatprep.subr.mxu0 0.0
    %v2115 = vand.u32 %v156, 4294901760
    %2116 = vmatpush1.xpose.msra.mxu0 %v2115
    %2117 = vmatprep.subr.mxu0 0.0
    %v2118 = vand.u32 %v159, 4294901760
    %2119 = vmatpush1.xpose.msra.mxu0 %v2118
    %2120 = vmatprep.subr.mxu0 0.0
    %v2121 = vand.u32 %v162, 4294901760
    %2122 = vmatpush1.xpose.msra.mxu0 %v2121
    %2123 = vmatprep.subr.mxu0 0.0
    %v2124 = vand.u32 %v165, 4294901760
    %2125 = vmatpush1.xpose.msra.mxu0 %v2124
    %2126 = vmatprep.subr.mxu0 0.0
    %v2127 = vand.u32 %v168, 4294901760
    %2128 = vmatpush1.xpose.msra.mxu0 %v2127
    %2129 = vmatprep.subr.mxu0 0.0
    %v2130 = vand.u32 %v171, 4294901760
    %2131 = vmatpush1.xpose.msra.mxu0 %v2130
    %2132 = vmatprep.mubr.f32.mxu0 0.0
    %v2133 = vand.u32 %v78, 4294901760
    %2134 = vmatmul.mubr.f32.gmra.mrb[0].mxu0 %v2133
    %v2135 = vpop.f32.mrb[0].mxu0
    %v2136 = vadd.f32 %v1853, %v2135
    %v2137 = vpop.f32.mrb[0].mxu0
    %2138 = vmatprep.mubr.f32.mxu0 0.0
    %v2139 = vand.u32 %v81, 4294901760
    %2140 = vmatmul.mubr.f32.gmra.mrb[0].mxu0 %v2139
    %v2141 = vpop.f32.mrb[0].mxu0
    %v2142 = vadd.f32 %v1859, %v2141
    %v2143 = vpop.f32.mrb[0].mxu0
    %2144 = vmatprep.mubr.f32.mxu0 0.0
    %v2145 = vand.u32 %v84, 4294901760
    %2146 = vmatmul.mubr.f32.gmra.mrb[0].mxu0 %v2145
    %v2147 = vpop.f32.mrb[0].mxu0
    %v2148 = vadd.f32 %v1865, %v2147
    %v2149 = vpop.f32.mrb[0].mxu0
    %2150 = vmatprep.mubr.f32.mxu0 0.0
    %v2151 = vand.u32 %v87, 4294901760
    %2152 = vmatmul.mubr.f32.gmra.mrb[0].mxu0 %v2151
    %v2153 = vpop.f32.mrb[0].mxu0
    %v2154 = vadd.f32 %v1871, %v2153
    %v2155 = vpop.f32.mrb[0].mxu0
    %2156 = vmatprep.mubr.f32.mxu0 0.0
    %v2157 = vand.u32 %v90, 4294901760
    %2158 = vmatmul.mubr.f32.gmra.mrb[0].mxu0 %v2157
    %v2159 = vpop.f32.mrb[0].mxu0
    %v2160 = vadd.f32 %v1877, %v2159
    %v2161 = vpop.f32.mrb[0].mxu0
    %2162 = vmatprep.mubr.f32.mxu0 0.0
    %v2163 = vand.u32 %v93, 4294901760
    %2164 = vmatmul.mubr.f32.gmra.mrb[0].mxu0 %v2163
    %v2165 = vpop.f32.mrb[0].mxu0
    %v2166 = vadd.f32 %v1883, %v2165
    %v2167 = vpop.f32.mrb[0].mxu0
    %2168 = vmatprep.mubr.f32.mxu0 0.0
    %v2169 = vand.u32 %v96, 4294901760
    %2170 = vmatmul.mubr.f32.gmra.mrb[0].mxu0 %v2169
    %v2171 = vpop.f32.mrb[0].mxu0
    %v2172 = vadd.f32 %v1889, %v2171
    %v2173 = vpop.f32.mrb[0].mxu0
    %2174 = vmatprep.mubr.f32.mxu0 0.0
    %v2175 = vand.u32 %v99, 4294901760
    %2176 = vmatmul.mubr.f32.gmra.mrb[0].mxu0 %v2175
    %v2177 = vpop.f32.mrb[0].mxu0
    %v2178 = vadd.f32 %v1895, %v2177
    %v2179 = vpop.f32.mrb[0].mxu0
    %2180 = vmatprep.mubr.f32.mxu0 0.0
    %v2181 = vand.u32 %v102, 4294901760
    %2182 = vmatmul.mubr.f32.gmra.mrb[0].mxu0 %v2181
    %v2183 = vpop.f32.mrb[0].mxu0
    %v2184 = vadd.f32 %v1901, %v2183
    %v2185 = vpop.f32.mrb[0].mxu0
    %2186 = vmatprep.mubr.f32.mxu0 0.0
    %v2187 = vand.u32 %v105, 4294901760
    %2188 = vmatmul.mubr.f32.gmra.mrb[0].mxu0 %v2187
    %v2189 = vpop.f32.mrb[0].mxu0
    %v2190 = vadd.f32 %v1907, %v2189
    %v2191 = vpop.f32.mrb[0].mxu0
    %2192 = vmatprep.mubr.f32.mxu0 0.0
    %v2193 = vand.u32 %v108, 4294901760
    %2194 = vmatmul.mubr.f32.gmra.mrb[0].mxu0 %v2193
    %v2195 = vpop.f32.mrb[0].mxu0
    %v2196 = vadd.f32 %v1913, %v2195
    %v2197 = vpop.f32.mrb[0].mxu0
    %2198 = vmatprep.mubr.f32.mxu0 0.0
    %v2199 = vand.u32 %v111, 4294901760
    %2200 = vmatmul.mubr.f32.gmra.mrb[0].mxu0 %v2199
    %v2201 = vpop.f32.mrb[0].mxu0
    %v2202 = vadd.f32 %v1919, %v2201
    %v2203 = vpop.f32.mrb[0].mxu0
    %2204 = vmatprep.mubr.f32.mxu0 0.0
    %v2205 = vand.u32 %v114, 4294901760
    %2206 = vmatmul.mubr.f32.gmra.mrb[0].mxu0 %v2205
    %v2207 = vpop.f32.mrb[0].mxu0
    %v2208 = vadd.f32 %v1925, %v2207
    %v2209 = vpop.f32.mrb[0].mxu0
    %2210 = vmatprep.mubr.f32.mxu0 0.0
    %v2211 = vand.u32 %v117, 4294901760
    %2212 = vmatmul.mubr.f32.gmra.mrb[0].mxu0 %v2211
    %v2213 = vpop.f32.mrb[0].mxu0
    %v2214 = vpop.f32.mrb[0].mxu0
    %2215 = vmatprep.mubr.f32.mxu0 0.0
    %v2216 = vand.u32 %v120, 4294901760
    %2217 = vmatmul.mubr.f32.gmra.mrb[0].mxu0 %v2216
    %v2218 = vpop.f32.mrb[0].mxu0
    %v2219 = vpop.f32.mrb[0].mxu0
    %2220 = vmatprep.mubr.f32.mxu0 0.0
    %v2221 = vand.u32 %v123, 4294901760
    %2222 = vmatmul.mubr.f32.gmra.mrb[0].mxu0 %v2221
    %v2223 = vpop.f32.mrb[0].mxu0
    %v2224 = vpop.f32.mrb[0].mxu0
    %2225 = vmatprep.mubr.f32.mxu0 0.0
    %v2226 = vand.u32 %v126, 4294901760
    %2227 = vmatmul.mubr.f32.gmra.mrb[0].mxu0 %v2226
    %v2228 = vpop.f32.mrb[0].mxu0
    %v2229 = vpop.f32.mrb[0].mxu0
    %v2230 = vadd.f32 %v1947, %v2229
    %2231 = vmatprep.mubr.f32.mxu0 0.0
    %v2232 = vand.u32 %v129, 4294901760
    %2233 = vmatmul.mubr.f32.gmra.mrb[0].mxu0 %v2232
    %v2234 = vpop.f32.mrb[0].mxu0
    %v2235 = vpop.f32.mrb[0].mxu0
    %v2236 = vadd.f32 %v1953, %v2235
    %2237 = vmatprep.mubr.f32.mxu0 0.0
    %v2238 = vand.u32 %v132, 4294901760
    %2239 = vmatmul.mubr.f32.gmra.mrb[0].mxu0 %v2238
    %v2240 = vpop.f32.mrb[0].mxu0
    %v2241 = vpop.f32.mrb[0].mxu0
    %v2242 = vadd.f32 %v1959, %v2241
    %2243 = vmatprep.mubr.f32.mxu0 0.0
    %v2244 = vand.u32 %v135, 4294901760
    %2245 = vmatmul.mubr.f32.gmra.mrb[0].mxu0 %v2244
    %v2246 = vpop.f32.mrb[0].mxu0
    %v2247 = vpop.f32.mrb[0].mxu0
    %v2248 = vadd.f32 %v1965, %v2247
    %2249 = vmatprep.mubr.f32.mxu0 0.0
    %v2250 = vand.u32 %v138, 4294901760
    %2251 = vmatmul.mubr.f32.gmra.mrb[0].mxu0 %v2250
    %v2252 = vpop.f32.mrb[0].mxu0
    %v2253 = vpop.f32.mrb[0].mxu0
    %v2254 = vadd.f32 %v1971, %v2253
    %2255 = vmatprep.mubr.f32.mxu0 0.0
    %v2256 = vand.u32 %v141, 4294901760
    %2257 = vmatmul.mubr.f32.gmra.mrb[0].mxu0 %v2256
    %v2258 = vpop.f32.mrb[0].mxu0
    %v2259 = vpop.f32.mrb[0].mxu0
    %v2260 = vadd.f32 %v1977, %v2259
    %2261 = vmatprep.mubr.f32.mxu0 0.0
    %v2262 = vand.u32 %v144, 4294901760
    %2263 = vmatmul.mubr.f32.gmra.mrb[0].mxu0 %v2262
    %v2264 = vpop.f32.mrb[0].mxu0
    %v2265 = vpop.f32.mrb[0].mxu0
    %v2266 = vadd.f32 %v1983, %v2265
    %2267 = vmatprep.mubr.f32.mxu0 0.0
    %v2268 = vand.u32 %v147, 4294901760
    %2269 = vmatmul.mubr.f32.gmra.mrb[0].mxu0 %v2268
    %v2270 = vpop.f32.mrb[0].mxu0
    %v2271 = vpop.f32.mrb[0].mxu0
    %v2272 = vadd.f32 %v1989, %v2271
    %2273 = vmatprep.mubr.f32.mxu0 0.0
    %v2274 = vand.u32 %v150, 4294901760
    %2275 = vmatmul.mubr.f32.gmra.mrb[0].mxu0 %v2274
    %v2276 = vpop.f32.mrb[0].mxu0
    %v2277 = vpop.f32.mrb[0].mxu0
    %v2278 = vadd.f32 %v1995, %v2277
    %2279 = vmatprep.mubr.f32.mxu0 0.0
    %v2280 = vand.u32 %v153, 4294901760
    %2281 = vmatmul.mubr.f32.gmra.mrb[0].mxu0 %v2280
    %v2282 = vpop.f32.mrb[0].mxu0
    %v2283 = vpop.f32.mrb[0].mxu0
    %v2284 = vadd.f32 %v2001, %v2283
    %2285 = vmatprep.mubr.f32.mxu0 0.0
    %v2286 = vand.u32 %v156, 4294901760
    %2287 = vmatmul.mubr.f32.gmra.mrb[0].mxu0 %v2286
    %v2288 = vpop.f32.mrb[0].mxu0
    %v2289 = vpop.f32.mrb[0].mxu0
    %v2290 = vadd.f32 %v2007, %v2289
    %2291 = vmatprep.mubr.f32.mxu0 0.0
    %v2292 = vand.u32 %v159, 4294901760
    %2293 = vmatmul.mubr.f32.gmra.mrb[0].mxu0 %v2292
    %v2294 = vpop.f32.mrb[0].mxu0
    %v2295 = vpop.f32.mrb[0].mxu0
    %v2296 = vadd.f32 %v2013, %v2295
    %2297 = vmatprep.mubr.f32.mxu0 0.0
    %v2298 = vand.u32 %v162, 4294901760
    %2299 = vmatmul.mubr.f32.gmra.mrb[0].mxu0 %v2298
    %v2300 = vpop.f32.mrb[0].mxu0
    %v2301 = vpop.f32.mrb[0].mxu0
    %v2302 = vadd.f32 %v2019, %v2301
    %2303 = vmatprep.mubr.f32.mxu0 0.0
    %v2304 = vand.u32 %v165, 4294901760
    %2305 = vmatmul.mubr.f32.gmra.mrb[0].mxu0 %v2304
    %v2306 = vpop.f32.mrb[0].mxu0
    %v2307 = vpop.f32.mrb[0].mxu0
    %2308 = vmatprep.mubr.f32.mxu0 0.0
    %v2309 = vand.u32 %v168, 4294901760
    %2310 = vmatmul.mubr.f32.gmra.mrb[0].mxu0 %v2309
    %v2311 = vpop.f32.mrb[0].mxu0
    %v2312 = vpop.f32.mrb[0].mxu0
    %2313 = vmatprep.mubr.f32.mxu0 0.0
    %v2314 = vand.u32 %v171, 4294901760
    %2315 = vmatmul.mubr.f32.gmra.mrb[0].mxu0 %v2314
    %v2316 = vpop.f32.mrb[0].mxu0
    %v2317 = vpop.f32.mrb[0].mxu0
    %2318 = vdwg.mxu0
    %v2319 = vld [vmem:[%s1] sm:$0xff]
    %v2320 = vld [vmem:[%s1 + $0x8] sm:$0xff]
    %v2321 = vld [vmem:[%s1 + $0x10] sm:$0xff]
    %v2322 = vld [vmem:[%s1 + $0x18] sm:$0xff]
    %v2323 = vld [vmem:[%s1 + $0x20] sm:$0xff]
    %v2324 = vld [vmem:[%s1 + $0x28] sm:$0xff]
    %v2325 = vld [vmem:[%s1 + $0x30] sm:$0xff]
    %v2326 = vld [vmem:[%s1 + $0x38] sm:$0xff]
    %v2327 = vld [vmem:[%s1 + $0x40] sm:$0xff]
    %v2328 = vld [vmem:[%s1 + $0x48] sm:$0xff]
    %v2329 = vld [vmem:[%s1 + $0x50] sm:$0xff]
    %v2330 = vld [vmem:[%s1 + $0x58] sm:$0xff]
    %v2331 = vld [vmem:[%s1 + $0x60] sm:$0xff]
    %v2332 = vadd.f32 %v2136, %v2319
    %v2333 = vadd.f32 %v2142, %v2320
    %v2334 = vadd.f32 %v2148, %v2321
    %v2335 = vadd.f32 %v2154, %v2322
    %v2336 = vadd.f32 %v2160, %v2323
    %v2337 = vadd.f32 %v2166, %v2324
    %v2338 = vadd.f32 %v2172, %v2325
    %v2339 = vadd.f32 %v2178, %v2326
    %v2340 = vadd.f32 %v2184, %v2327
    %v2341 = vadd.f32 %v2190, %v2328
    %v2342 = vadd.f32 %v2196, %v2329
    %v2343 = vadd.f32 %v2202, %v2330
    %v2344 = vadd.f32 %v2208, %v2331
    %v2345 = vmul.f32 %v2332, 1.442695
    %v2346 = vpow.pop %v2345
    %v2347 = vmul.f32 %v2333, 1.442695
    %v2348 = vpow.pop %v2347
    %v2349 = vmul.f32 %v2334, 1.442695
    %v2350 = vpow.pop %v2349
    %v2351 = vmul.f32 %v2335, 1.442695
    %v2352 = vpow.pop %v2351
    %v2353 = vmul.f32 %v2336, 1.442695
    %v2354 = vpow.pop %v2353
    %v2355 = vmul.f32 %v2337, 1.442695
    %v2356 = vpow.pop %v2355
    %v2357 = vmul.f32 %v2338, 1.442695
    %v2358 = vpow.pop %v2357
    %v2359 = vmul.f32 %v2339, 1.442695
    %v2360 = vpow.pop %v2359
    %v2361 = vmul.f32 %v2340, 1.442695
    %v2362 = vpow.pop %v2361
    %v2363 = vmul.f32 %v2341, 1.442695
    %v2364 = vpow.pop %v2363
    %v2365 = vmul.f32 %v2342, 1.442695
    %v2366 = vpow.pop %v2365
    %v2367 = vmul.f32 %v2343, 1.442695
    %v2368 = vpow.pop %v2367
    %v2369 = vmul.f32 %v2344, 1.442695
    %v2370 = vpow.pop %v2369
    %2371 = vadd.xlane.f32.xlu0 %v2346
    %v2372 = vpop.xlane.xlu0 %2371
    %2373 = vadd.xlane.f32.xlu0 %v2348
    %v2374 = vpop.xlane.xlu0 %2373
    %2375 = vadd.xlane.f32.xlu0 %v2350
    %v2376 = vpop.xlane.xlu0 %2375
    %2377 = vadd.xlane.f32.xlu0 %v2352
    %v2378 = vpop.xlane.xlu0 %2377
    %2379 = vadd.xlane.f32.xlu0 %v2354
    %v2380 = vpop.xlane.xlu0 %2379
    %2381 = vadd.xlane.f32.xlu0 %v2356
    %v2382 = vpop.xlane.xlu0 %2381
    %2383 = vadd.xlane.f32.xlu0 %v2358
    %v2384 = vpop.xlane.xlu0 %2383
    %2385 = vadd.xlane.f32.xlu0 %v2360
    %v2386 = vpop.xlane.xlu0 %2385
    %2387 = vadd.xlane.f32.xlu0 %v2362
    %v2388 = vpop.xlane.xlu0 %2387
    %2389 = vadd.xlane.f32.xlu0 %v2364
    %v2390 = vpop.xlane.xlu0 %2389
    %2391 = vadd.xlane.f32.xlu0 %v2366
    %v2392 = vpop.xlane.xlu0 %2391
    %2393 = vadd.xlane.f32.xlu0 %v2368
    %v2394 = vpop.xlane.xlu0 %2393
    %2395 = vadd.xlane.f32.xlu0 %v2370
    %v2396 = vpop.xlane.xlu0 %2395
    %v2397 = vmul.f32 %v44, %v44
    %v2398 = vmul.f32 %v45, %v45
    %v2399 = vmul.f32 %v46, %v46
    %v2400 = vmul.f32 %v47, %v47
    %v2401 = vmul.f32 %v48, %v48
    %v2402 = vmul.f32 %v49, %v49
    %v2403 = vmul.f32 %v50, %v50
    %v2404 = vmul.f32 %v51, %v51
    %v2405 = vmul.f32 %v52, %v52
    %v2406 = vmul.f32 %v53, %v53
    %v2407 = vmul.f32 %v54, %v54
    %v2408 = vmul.f32 %v55, %v55
    %v2409 = vmul.f32 %v56, %v56
    %v2410 = vsel %vm76, %v2397, 0.0
    %2411 = vadd.xlane.f32.xlu0 %v2410
    %v2412 = vpop.xlane.xlu0 %2411
    %v2413 = vsel %vm76, %v2398, 0.0
    %2414 = vadd.xlane.f32.xlu0 %v2413
    %v2415 = vpop.xlane.xlu0 %2414
    %v2416 = vsel %vm76, %v2399, 0.0
    %2417 = vadd.xlane.f32.xlu0 %v2416
    %v2418 = vpop.xlane.xlu0 %2417
    %v2419 = vsel %vm76, %v2400, 0.0
    %2420 = vadd.xlane.f32.xlu0 %v2419
    %v2421 = vpop.xlane.xlu0 %2420
    %v2422 = vsel %vm76, %v2401, 0.0
    %2423 = vadd.xlane.f32.xlu0 %v2422
    %v2424 = vpop.xlane.xlu0 %2423
    %v2425 = vsel %vm76, %v2402, 0.0
    %2426 = vadd.xlane.f32.xlu0 %v2425
    %v2427 = vpop.xlane.xlu0 %2426
    %v2428 = vsel %vm76, %v2403, 0.0
    %2429 = vadd.xlane.f32.xlu0 %v2428
    %v2430 = vpop.xlane.xlu0 %2429
    %v2431 = vsel %vm76, %v2404, 0.0
    %2432 = vadd.xlane.f32.xlu0 %v2431
    %v2433 = vpop.xlane.xlu0 %2432
    %v2434 = vsel %vm76, %v2405, 0.0
    %2435 = vadd.xlane.f32.xlu0 %v2434
    %v2436 = vpop.xlane.xlu0 %2435
    %v2437 = vsel %vm76, %v2406, 0.0
    %2438 = vadd.xlane.f32.xlu0 %v2437
    %v2439 = vpop.xlane.xlu0 %2438
    %v2440 = vsel %vm76, %v2407, 0.0
    %2441 = vadd.xlane.f32.xlu0 %v2440
    %v2442 = vpop.xlane.xlu0 %2441
    %v2443 = vsel %vm76, %v2408, 0.0
    %2444 = vadd.xlane.f32.xlu0 %v2443
    %v2445 = vpop.xlane.xlu0 %2444
    %v2446 = vsel %vm76, %v2409, 0.0
    %2447 = vadd.xlane.f32.xlu0 %v2446
    %v2448 = vpop.xlane.xlu0 %2447
    %v2449 = vlog2.pop %v2372
    %v2450 = vmul.f32 %v2449, 0.6931472
    %v2451 = vlog2.pop %v2374
    %v2452 = vmul.f32 %v2451, 0.6931472
    %v2453 = vlog2.pop %v2376
    %v2454 = vmul.f32 %v2453, 0.6931472
    %v2455 = vlog2.pop %v2378
    %v2456 = vmul.f32 %v2455, 0.6931472
    %v2457 = vlog2.pop %v2380
    %v2458 = vmul.f32 %v2457, 0.6931472
    %v2459 = vlog2.pop %v2382
    %v2460 = vmul.f32 %v2459, 0.6931472
    %v2461 = vlog2.pop %v2384
    %v2462 = vmul.f32 %v2461, 0.6931472
    %v2463 = vlog2.pop %v2386
    %v2464 = vmul.f32 %v2463, 0.6931472
    %v2465 = vlog2.pop %v2388
    %v2466 = vmul.f32 %v2465, 0.6931472
    %v2467 = vlog2.pop %v2390
    %v2468 = vmul.f32 %v2467, 0.6931472
    %v2469 = vlog2.pop %v2392
    %v2470 = vmul.f32 %v2469, 0.6931472
    %v2471 = vlog2.pop %v2394
    %v2472 = vmul.f32 %v2471, 0.6931472
    %v2473 = vlog2.pop %v2396
    %v2474 = vmul.f32 %v2473, 0.6931472
    %v2475 = vsub.f32 %v2450, %v2412
    %v2476 = vsub.f32 %v2452, %v2415
    %v2477 = vsub.f32 %v2454, %v2418
    %v2478 = vsub.f32 %v2456, %v2421
    %v2479 = vsub.f32 %v2458, %v2424
    %v2480 = vsub.f32 %v2460, %v2427
    %v2481 = vsub.f32 %v2462, %v2430
    %v2482 = vsub.f32 %v2464, %v2433
    %v2483 = vsub.f32 %v2466, %v2436
    %v2484 = vsub.f32 %v2468, %v2439
    %v2485 = vsub.f32 %v2470, %v2442
    %v2486 = vsub.f32 %v2472, %v2445
    %v2487 = vsub.f32 %v2474, %v2448
    %v2488 = vadd.f32 %v2475, 0.0
    %v2489 = vadd.f32 %v2476, 0.0
    %v2490 = vadd.f32 %v2477, 0.0
    %v2491 = vadd.f32 %v2478, 0.0
    %v2492 = vadd.f32 %v2479, 0.0
    %v2493 = vadd.f32 %v2480, 0.0
    %v2494 = vadd.f32 %v2481, 0.0
    %v2495 = vadd.f32 %v2482, 0.0
    %v2496 = vadd.f32 %v2483, 0.0
    %v2497 = vadd.f32 %v2484, 0.0
    %v2498 = vadd.f32 %v2485, 0.0
    %v2499 = vadd.f32 %v2486, 0.0
    %v2500 = vadd.f32 %v2487, 0.0
    %v2501 = vadd.f32 %v2230, %v2319
    %v2502 = vadd.f32 %v2236, %v2320
    %v2503 = vadd.f32 %v2242, %v2321
    %v2504 = vadd.f32 %v2248, %v2322
    %v2505 = vadd.f32 %v2254, %v2323
    %v2506 = vadd.f32 %v2260, %v2324
    %v2507 = vadd.f32 %v2266, %v2325
    %v2508 = vadd.f32 %v2272, %v2326
    %v2509 = vadd.f32 %v2278, %v2327
    %v2510 = vadd.f32 %v2284, %v2328
    %v2511 = vadd.f32 %v2290, %v2329
    %v2512 = vadd.f32 %v2296, %v2330
    %v2513 = vadd.f32 %v2302, %v2331
    %v2514 = vmul.f32 %v2501, 1.442695
    %v2515 = vpow.pop %v2514
    %v2516 = vmul.f32 %v2502, 1.442695
    %v2517 = vpow.pop %v2516
    %v2518 = vmul.f32 %v2503, 1.442695
    %v2519 = vpow.pop %v2518
    %v2520 = vmul.f32 %v2504, 1.442695
    %v2521 = vpow.pop %v2520
    %v2522 = vmul.f32 %v2505, 1.442695
    %v2523 = vpow.pop %v2522
    %v2524 = vmul.f32 %v2506, 1.442695
    %v2525 = vpow.pop %v2524
    %v2526 = vmul.f32 %v2507, 1.442695
    %v2527 = vpow.pop %v2526
    %v2528 = vmul.f32 %v2508, 1.442695
    %v2529 = vpow.pop %v2528
    %v2530 = vmul.f32 %v2509, 1.442695
    %v2531 = vpow.pop %v2530
    %v2532 = vmul.f32 %v2510, 1.442695
    %v2533 = vpow.pop %v2532
    %v2534 = vmul.f32 %v2511, 1.442695
    %v2535 = vpow.pop %v2534
    %v2536 = vmul.f32 %v2512, 1.442695
    %v2537 = vpow.pop %v2536
    %v2538 = vmul.f32 %v2513, 1.442695
    %v2539 = vpow.pop %v2538
    %2540 = vadd.xlane.f32.xlu0 %v2515
    %v2541 = vpop.xlane.xlu0 %2540
    %2542 = vadd.xlane.f32.xlu0 %v2517
    %v2543 = vpop.xlane.xlu0 %2542
    %2544 = vadd.xlane.f32.xlu0 %v2519
    %v2545 = vpop.xlane.xlu0 %2544
    %2546 = vadd.xlane.f32.xlu0 %v2521
    %v2547 = vpop.xlane.xlu0 %2546
    %2548 = vadd.xlane.f32.xlu0 %v2523
    %v2549 = vpop.xlane.xlu0 %2548
    %2550 = vadd.xlane.f32.xlu0 %v2525
    %v2551 = vpop.xlane.xlu0 %2550
    %2552 = vadd.xlane.f32.xlu0 %v2527
    %v2553 = vpop.xlane.xlu0 %2552
    %2554 = vadd.xlane.f32.xlu0 %v2529
    %v2555 = vpop.xlane.xlu0 %2554
    %2556 = vadd.xlane.f32.xlu0 %v2531
    %v2557 = vpop.xlane.xlu0 %2556
    %2558 = vadd.xlane.f32.xlu0 %v2533
    %v2559 = vpop.xlane.xlu0 %2558
    %2560 = vadd.xlane.f32.xlu0 %v2535
    %v2561 = vpop.xlane.xlu0 %2560
    %2562 = vadd.xlane.f32.xlu0 %v2537
    %v2563 = vpop.xlane.xlu0 %2562
    %2564 = vadd.xlane.f32.xlu0 %v2539
    %v2565 = vpop.xlane.xlu0 %2564
    %v2566 = vmul.f32 %v60, %v60
    %v2567 = vmul.f32 %v61, %v61
    %v2568 = vmul.f32 %v62, %v62
    %v2569 = vmul.f32 %v63, %v63
    %v2570 = vmul.f32 %v64, %v64
    %v2571 = vmul.f32 %v65, %v65
    %v2572 = vmul.f32 %v66, %v66
    %v2573 = vmul.f32 %v67, %v67
    %v2574 = vmul.f32 %v68, %v68
    %v2575 = vmul.f32 %v69, %v69
    %v2576 = vmul.f32 %v70, %v70
    %v2577 = vmul.f32 %v71, %v71
    %v2578 = vmul.f32 %v72, %v72
    %v2579 = vsel %vm76, %v2566, 0.0
    %2580 = vadd.xlane.f32.xlu0 %v2579
    %v2581 = vpop.xlane.xlu0 %2580
    %v2582 = vsel %vm76, %v2567, 0.0
    %2583 = vadd.xlane.f32.xlu0 %v2582
    %v2584 = vpop.xlane.xlu0 %2583
    %v2585 = vsel %vm76, %v2568, 0.0
    %2586 = vadd.xlane.f32.xlu0 %v2585
    %v2587 = vpop.xlane.xlu0 %2586
    %v2588 = vsel %vm76, %v2569, 0.0
    %2589 = vadd.xlane.f32.xlu0 %v2588
    %v2590 = vpop.xlane.xlu0 %2589
    %v2591 = vsel %vm76, %v2570, 0.0
    %2592 = vadd.xlane.f32.xlu0 %v2591
    %v2593 = vpop.xlane.xlu0 %2592
    %v2594 = vsel %vm76, %v2571, 0.0
    %2595 = vadd.xlane.f32.xlu0 %v2594
    %v2596 = vpop.xlane.xlu0 %2595
    %v2597 = vsel %vm76, %v2572, 0.0
    %2598 = vadd.xlane.f32.xlu0 %v2597
    %v2599 = vpop.xlane.xlu0 %2598
    %v2600 = vsel %vm76, %v2573, 0.0
    %2601 = vadd.xlane.f32.xlu0 %v2600
    %v2602 = vpop.xlane.xlu0 %2601
    %v2603 = vsel %vm76, %v2574, 0.0
    %2604 = vadd.xlane.f32.xlu0 %v2603
    %v2605 = vpop.xlane.xlu0 %2604
    %v2606 = vsel %vm76, %v2575, 0.0
    %2607 = vadd.xlane.f32.xlu0 %v2606
    %v2608 = vpop.xlane.xlu0 %2607
    %v2609 = vsel %vm76, %v2576, 0.0
    %2610 = vadd.xlane.f32.xlu0 %v2609
    %v2611 = vpop.xlane.xlu0 %2610
    %v2612 = vsel %vm76, %v2577, 0.0
    %2613 = vadd.xlane.f32.xlu0 %v2612
    %v2614 = vpop.xlane.xlu0 %2613
    %v2615 = vsel %vm76, %v2578, 0.0
    %2616 = vadd.xlane.f32.xlu0 %v2615
    %v2617 = vpop.xlane.xlu0 %2616
    %v2618 = vlog2.pop %v2541
    %v2619 = vmul.f32 %v2618, 0.6931472
    %v2620 = vlog2.pop %v2543
    %v2621 = vmul.f32 %v2620, 0.6931472
    %v2622 = vlog2.pop %v2545
    %v2623 = vmul.f32 %v2622, 0.6931472
    %v2624 = vlog2.pop %v2547
    %v2625 = vmul.f32 %v2624, 0.6931472
    %v2626 = vlog2.pop %v2549
    %v2627 = vmul.f32 %v2626, 0.6931472
    %v2628 = vlog2.pop %v2551
    %v2629 = vmul.f32 %v2628, 0.6931472
    %v2630 = vlog2.pop %v2553
    %v2631 = vmul.f32 %v2630, 0.6931472
    %v2632 = vlog2.pop %v2555
    %v2633 = vmul.f32 %v2632, 0.6931472
    %v2634 = vlog2.pop %v2557
    %v2635 = vmul.f32 %v2634, 0.6931472
    %v2636 = vlog2.pop %v2559
    %v2637 = vmul.f32 %v2636, 0.6931472
    %v2638 = vlog2.pop %v2561
    %v2639 = vmul.f32 %v2638, 0.6931472
    %v2640 = vlog2.pop %v2563
    %v2641 = vmul.f32 %v2640, 0.6931472
    %v2642 = vlog2.pop %v2565
    %v2643 = vmul.f32 %v2642, 0.6931472
    %v2644 = vsub.f32 %v2619, %v2581
    %v2645 = vsub.f32 %v2621, %v2584
    %v2646 = vsub.f32 %v2623, %v2587
    %v2647 = vsub.f32 %v2625, %v2590
    %v2648 = vsub.f32 %v2627, %v2593
    %v2649 = vsub.f32 %v2629, %v2596
    %v2650 = vsub.f32 %v2631, %v2599
    %v2651 = vsub.f32 %v2633, %v2602
    %v2652 = vsub.f32 %v2635, %v2605
    %v2653 = vsub.f32 %v2637, %v2608
    %v2654 = vsub.f32 %v2639, %v2611
    %v2655 = vsub.f32 %v2641, %v2614
    %v2656 = vsub.f32 %v2643, %v2617
    %v2657 = vadd.f32 %v2488, %v2644
    %v2658 = vadd.f32 %v2489, %v2645
    %v2659 = vadd.f32 %v2490, %v2646
    %v2660 = vadd.f32 %v2491, %v2647
    %v2661 = vadd.f32 %v2492, %v2648
    %v2662 = vadd.f32 %v2493, %v2649
    %v2663 = vadd.f32 %v2494, %v2650
    %v2664 = vadd.f32 %v2495, %v2651
    %v2665 = vadd.f32 %v2496, %v2652
    %v2666 = vadd.f32 %v2497, %v2653
    %v2667 = vadd.f32 %v2498, %v2654
    %v2668 = vadd.f32 %v2499, %v2655
    %v2669 = vadd.f32 %v2500, %v2656
    %vm2670 = vweird.f32 %v2657
    %vm2671 = vweird.f32 %v2658
    %vm2672 = vweird.f32 %v2659
    %vm2673 = vweird.f32 %v2660
    %vm2674 = vweird.f32 %v2661
    %vm2675 = vweird.f32 %v2662
    %vm2676 = vweird.f32 %v2663
    %vm2677 = vweird.f32 %v2664
    %vm2678 = vweird.f32 %v2665
    %vm2679 = vweird.f32 %v2666
    %vm2680 = vweird.f32 %v2667
    %vm2681 = vweird.f32 %v2668
    %vm2682 = vweird.f32 %v2669
    %vm2683 = vmxor %vm2670, 1
    %vm2684 = vmxor %vm2671, 1
    %vm2685 = vmxor %vm2672, 1
    %vm2686 = vmxor %vm2673, 1
    %vm2687 = vmxor %vm2674, 1
    %vm2688 = vmxor %vm2675, 1
    %vm2689 = vmxor %vm2676, 1
    %vm2690 = vmxor %vm2677, 1
    %vm2691 = vmxor %vm2678, 1
    %vm2692 = vmxor %vm2679, 1
    %vm2693 = vmxor %vm2680, 1
    %vm2694 = vmxor %vm2681, 1
    %vm2695 = vmxor %vm2682, 1
    %v2696 = vsel %vm2683, %v2657, 0.0
    %v2697 = vsel %vm2684, %v2658, 0.0
    %v2698 = vsel %vm2685, %v2659, 0.0
    %v2699 = vsel %vm2686, %v2660, 0.0
    %v2700 = vsel %vm2687, %v2661, 0.0
    %v2701 = vsel %vm2688, %v2662, 0.0
    %v2702 = vsel %vm2689, %v2663, 0.0
    %v2703 = vsel %vm2690, %v2664, 0.0
    %v2704 = vsel %vm2691, %v2665, 0.0
    %v2705 = vsel %vm2692, %v2666, 0.0
    %v2706 = vsel %vm2693, %v2667, 0.0
    %v2707 = vsel %vm2694, %v2668, 0.0
    %v2708 = vsel %vm2695, %v2669, 0.0
    %vm2709 = vcmask 7168
    %v2710 = vsel %vm2709, %v2696, 0.0
    %v2711 = vsel %vm2709, %v2697, 0.0
    %v2712 = vadd.f32 %v2710, %v2711
    %v2713 = vsel %vm2709, %v2698, 0.0
    %v2714 = vadd.f32 %v2712, %v2713
    %v2715 = vsel %vm2709, %v2699, 0.0
    %v2716 = vadd.f32 %v2714, %v2715
    %v2717 = vsel %vm2709, %v2700, 0.0
    %v2718 = vadd.f32 %v2716, %v2717
    %v2719 = vsel %vm2709, %v2701, 0.0
    %v2720 = vadd.f32 %v2718, %v2719
    %v2721 = vsel %vm2709, %v2702, 0.0
    %v2722 = vadd.f32 %v2720, %v2721
    %v2723 = vsel %vm2709, %v2703, 0.0
    %v2724 = vadd.f32 %v2722, %v2723
    %v2725 = vsel %vm2709, %v2704, 0.0
    %v2726 = vadd.f32 %v2724, %v2725
    %v2727 = vsel %vm2709, %v2705, 0.0
    %v2728 = vadd.f32 %v2726, %v2727
    %v2729 = vsel %vm2709, %v2706, 0.0
    %v2730 = vadd.f32 %v2728, %v2729
    %v2731 = vsel %vm2709, %v2707, 0.0
    %v2732 = vadd.f32 %v2730, %v2731
    %v2733 = vsel %vm2709, %v2708, 0.0
    %v2734 = vadd.f32 %v2732, %v2733
    %2735 = vadd.xlane.f32.xlu0 %v2734
    %v2736 = vpop.xlane.xlu0 %2735
    %v2737 = vrot.slane %v2736, 4
    %v2738 = vadd.f32 %v2736, %v2737
    %v2739 = vrot.slane %v2738, 2
    %v2740 = vadd.f32 %v2738, %v2739
    %v2741 = vrot.slane %v2740, 1
    %v2742 = vadd.f32 %v2740, %v2741
    %s2743 = vtos %v2742
    %v2744 = vrcp.pop 208.0
    %s2745 = vtos %v2744
    %s2746 = smul.f32 %s2743, %s2745
    %s2747 = scalar_lea.smem [#allocation2], 0
    %2748 = sst [smem:[%s2747]] %s2746
    // Predicated region
    $region10: #{tpu_custom_call.1} parent=1 // pred_check
      _
    $region11: #{tpu_custom_call.1} parent=1 // pred_check_branch
      %2750 = sbr.rel (0) target = $region13
    $region12: #{tpu_custom_call.1} parent=1 // pred_region
      %s2752 = ssub.s32 16, 16
      %2753 = vsyncadd [#allocation3], %s2752
      %2756 = dma.smem_to_hbm [#allocation2], 16, %s2, [#allocation3]
    $region13: #{tpu_custom_call.1} parent=1 // pred_fallthru
      _
    // Predicated region
    $region14: #{tpu_custom_call.1} parent=1 // pred_check
      _
    $region15: #{tpu_custom_call.1} parent=1 // pred_check_branch
      %2758 = sbr.rel (0) target = $region17
    $region16: #{tpu_custom_call.1} parent=1 // pred_region
      %2759 = dma.done [#allocation3], 16
    $region17: #{tpu_custom_call.1} parent=1 // pred_fallthru
      _
    %2760 = sfence
    %2761 = vsyncpa [#allocation3], 1

</llo_original>
